<compile_context>
chip_gen: v7x
topology: tpu7x:2x2x1
jax: 0.10.0
libtpu: 0.0.40
codegen_flags: <defaults>
</compile_context>

<pallas_src>
import math

import jax
import jax.numpy as jnp
from jax.experimental import pallas as pl
from jax.experimental.pallas import tpu as pltpu

ARGS = dict(seq_input=8, seq_output=8, Kt=2, input_size=4,
            tcn_size=8, gcn_size=8, num_nodes=16, dropout=0.1)


# -----------------------------------------------------------------------------
# One-time weight packing (runs ONCE, outside the jitted forward).
#
# Kernel activation layout: one 2-D slab (B*N, C*Tf) with element
# [b*N + n, c*Tf + t] == x[b, c, n, t].  Every stage is then a plain 2-D MXU
# matmul / VPU op on that slab.
# -----------------------------------------------------------------------------


def pack_params(params, supports, args, batch):
    Tf = args['seq_input']; N = args['num_nodes']; Cin = args['input_size']
    tcn = args['tcn_size']; S = args['seq_output']; Kt = args['Kt']
    K = supports.shape[0]
    B = batch
    tv1 = S - 2 * (Kt - 1)                  # valid T at first LayerNorm
    tv2 = tv1 - 2 * (Kt - 1)                # valid T at second LayerNorm
    WCOLS = tcn * Tf                        # 64: max lane width of any stage
    f32 = jnp.float32

    woff, wparts, wrows = {}, [], 0
    roff, rparts = {}, []

    def add_w(name, m):                     # 2-D weight block -> W slab
        nonlocal wrows
        m = jnp.asarray(m, f32)
        m = jnp.pad(m, ((0, 0), (0, WCOLS - m.shape[1])))
        woff[name] = (wrows, m.shape[0])
        wparts.append(m)
        wrows += m.shape[0]

    def add_r(name, v):                     # 1-D bias/mask row -> R slab
        v = jnp.asarray(v, f32).reshape(1, -1)
        v = jnp.pad(v, ((0, 0), (0, WCOLS - v.shape[1])))
        roff[name] = len(rparts)
        rparts.append(v)

    def band(w):
        # Conv2d weight (Cout, Cin, Kw) -> banded (Cin*Tf, Cout*Tf) matrix.
        Cout, Ci, Kw = w.shape
        s = jnp.arange(Tf)[:, None]; t = jnp.arange(Tf)[None, :]
        d = s - t
        inside = (d >= 0) & (d < Kw)
        dk = jnp.clip(d, 0, Kw - 1)
        wk = jnp.where(inside[None, None], w[:, :, dk], 0.0)   # (Cout,Ci,Tf,Tf)
        return jnp.transpose(wk, (1, 2, 0, 3)).reshape(Ci * Tf, Cout * Tf)

    def resid(Ci, Cout, Kw):
        # residual: out[o, t] += x[o, t + Kw - 1]; zero for padded channels.
        s = jnp.arange(Tf)[:, None]; t = jnp.arange(Tf)[None, :]
        r = jnp.einsum('co,st->csot', jnp.eye(Ci, Cout, dtype=f32),
                       (s == t + (Kw - 1)).astype(f32))
        return r.reshape(Ci * Tf, Cout * Tf)

    def add_temporal(pre, w1, b1, w2, b2):
        Cout, Ci, Kw = w1.shape
        add_w(pre + '_m1', band(w1) + resid(Ci, Cout, Kw))     # tcn1 + residual
        add_w(pre + '_m2', band(w2))                           # tcn2 (gate)
        add_r(pre + '_b1', jnp.repeat(b1, Tf))
        add_r(pre + '_b2', jnp.repeat(b2, Tf))

    def add_graph(pre, w, b):
        # (K, F, O) -> per-support (F*Tf, O*Tf) block-diag-in-time matrices.
        eye_t = jnp.eye(Tf, dtype=f32)
        for k in range(K):
            mk = jnp.einsum('fo,st->fsot', w[k], eye_t)
            add_w(f'{pre}_g{k}', mk.reshape(w.shape[1] * Tf, w.shape[2] * Tf))
        add_r(pre + '_b', jnp.repeat(b, Tf))

    def add_ln(pre, g, b, Tlen):
        # LayerNorm affine (C, N, Tlen) -> (B*N, C*Tf) rows + validity mask.
        def rows(p):
            p = jnp.pad(p, ((0, 0), (0, 0), (0, Tf - Tlen)))
            r = jnp.transpose(p, (1, 0, 2)).reshape(N, -1)
            return jnp.tile(r, (B, 1))
        add_w(pre + '_g', rows(g))
        add_w(pre + '_bb', rows(b))
        add_r(pre + '_mask',
              jnp.tile((jnp.arange(Tf) < Tlen).astype(f32), g.shape[0]))

    st1, st2, last = params['st1'], params['st2'], params['last']
    add_temporal('t1a', st1['t1_w1'], st1['t1_b1'], st1['t1_w2'], st1['t1_b2'])
    add_graph('g1', st1['gc_w'], st1['gc_b'])
    add_temporal('t1b', st1['t2_w1'], st1['t2_b1'], st1['t2_w2'], st1['t2_b2'])
    add_ln('ln1', st1['ln_g'], st1['ln_b'], tv1)
    add_temporal('t2a', st2['t1_w1'], st2['t1_b1'], st2['t1_w2'], st2['t1_b2'])
    add_graph('g2', st2['gc_w'], st2['gc_b'])
    add_temporal('t2b', st2['t2_w1'], st2['t2_b1'], st2['t2_w2'], st2['t2_b2'])
    add_ln('ln2', st2['ln_g'], st2['ln_b'], tv2)
    add_temporal('tl', last['w1'], last['b1'], last['w2'], last['b2'])

    # output 1x1 Conv1d: weight (S, C) -> (C*Tf, S) matmul that selects t == 0
    sel = (jnp.arange(Tf) == 0).astype(f32)
    add_w('wout',
          jnp.einsum('sc,t->cts', params['out_w'], sel).reshape(tcn * Tf, S))
    add_r('out_b', params['out_b'])

    if wrows % 8:
        pad = 8 - wrows % 8
        wparts.append(jnp.zeros((pad, WCOLS), f32))
        wrows += pad
    while len(rparts) % 8:
        rparts.append(jnp.zeros((1, WCOLS), f32))

    # supports -> per-support block-diagonal (B*N, B*N) node-aggregation matrix
    eye_b = jnp.eye(B, dtype=f32)
    a_slab = jnp.concatenate(
        [jnp.kron(eye_b, jnp.asarray(supports[k], f32)) for k in range(K)],
        axis=0)

    packed = dict(w=jnp.concatenate(wparts, axis=0),      # (1024, 64)
                  a=a_slab,                                # (K*B*N, B*N)
                  r=jnp.concatenate(rparts, axis=0))       # (16, 64)
    meta = dict(B=B, N=N, K=K, Cin=Cin, Tf=Tf, S=S,
                woff=woff, roff=roff,
                inv_cnt1=1.0 / float(tcn * N * tv1),
                inv_cnt2=1.0 / float(tcn * N * tv2))
    return packed, meta


# -----------------------------------------------------------------------------
# Fused forward kernel (single invocation, no grid)
# -----------------------------------------------------------------------------


def _make_kernel(meta):
    B, N, K, S = meta['B'], meta['N'], meta['K'], meta['S']
    BN = B * N
    woff, roff = meta['woff'], meta['roff']
    inv_cnt1, inv_cnt2 = meta['inv_cnt1'], meta['inv_cnt2']

    def sigmoid(v):                          # overflow-safe, EUP tanh
        return 0.5 * jnp.tanh(0.5 * v) + 0.5

    def kernel(x_ref, w_ref, a_ref, r_ref, o_ref):
        rall = r_ref[...]                    # (rows, 64): biases + LN masks

        def W(name):                         # static row-slice of weight slab
            o, r = woff[name]
            return w_ref[o:o + r, :]

        def R(name):                         # one (1, 64) bias/mask row
            i = roff[name]
            return rall[i:i + 1, :]

        def fit(x, m):                       # drop zero tail lanes if needed
            return x[:, :m.shape[0]] if x.shape[1] > m.shape[0] else x

        def temporal(x, pre):
            m1, m2 = W(pre + '_m1'), W(pre + '_m2')
            xs = fit(x, m1)
            y1 = jnp.dot(xs, m1, preferred_element_type=jnp.float32) + R(pre + '_b1')
            y2 = jnp.dot(xs, m2, preferred_element_type=jnp.float32) + R(pre + '_b2')
            return y1 * sigmoid(y2)

        def graph(x, pre):
            acc = None
            for k in range(K):               # accumulate, no lane concat
                agg = jnp.dot(a_ref[k * BN:(k + 1) * BN, :], x,
                              preferred_element_type=jnp.float32)
                mk = W(f'{pre}_g{k}')
                term = jnp.dot(fit(agg, mk), mk,
                               preferred_element_type=jnp.float32)
                acc = term if acc is None else acc + term
            return jnp.maximum(acc + R(pre + '_b'), 0.0)

        def layernorm(x, pre, inv_cnt):
            msk = R(pre + '_mask')
            parts = []
            for b in range(B):               # per-sample stats (16-row groups)
                xb = x[b * N:(b + 1) * N, :]
                xm = xb * msk
                s1 = jnp.sum(jnp.sum(xm, axis=1, keepdims=True),
                             axis=0, keepdims=True)
                s2 = jnp.sum(jnp.sum(xm * xm, axis=1, keepdims=True),
                             axis=0, keepdims=True)
                mu = s1 * inv_cnt
                var = jnp.maximum(s2 * inv_cnt - mu * mu, 0.0)
                parts.append((xb - mu) * jax.lax.rsqrt(var + 1e-5))
            xn = parts[0] if B == 1 else jnp.concatenate(parts, axis=0)
            return xn * W(pre + '_g') + W(pre + '_bb')

        x = x_ref[...]                                       # (B*N, Cin*Tf)
        # ---- ST layer 1 ----
        x = temporal(x, 't1a')
        x = graph(x, 'g1')
        x = temporal(x, 't1b')
        x = layernorm(x, 'ln1', inv_cnt1)
        # TODO(synk): dropout is identity (eval-mode semantics).
        # ---- ST layer 2 ----
        x = temporal(x, 't2a')
        x = graph(x, 'g2')
        x = temporal(x, 't2b')
        x = layernorm(x, 'ln2', inv_cnt2)
        # ---- last temporal layer (Kt == remaining T; only t == 0 valid) ----
        x = temporal(x, 'tl')
        # ---- output 1x1 Conv1d (weight also selects t == 0) ----
        wo = W('wout')
        y = jnp.dot(fit(x, wo), wo,
                    preferred_element_type=jnp.float32) + R('out_b')
        for b in range(B):
            o_ref[b, :, :] = y[b * N:(b + 1) * N, :S]

    return kernel


def build_forward(meta):
    B, N, Cin, Tf, S = meta['B'], meta['N'], meta['Cin'], meta['Tf'], meta['S']
    kernel = _make_kernel(meta)
    vmem = pl.BlockSpec(memory_space=pltpu.MemorySpace.VMEM)

    @jax.jit
    def forward(packed, inputs):
        # (B, T, N, F) -> (B*N, Cin*Tf); element [b*N+n, f*Tf+t] = inputs[b,t,n,f]
        x = jnp.transpose(inputs[:, :Tf], (0, 2, 3, 1)).reshape(B * N, Cin * Tf)
        out = pl.pallas_call(
            kernel,
            out_shape=jax.ShapeDtypeStruct((B, N, S), jnp.float32),
            in_specs=[vmem, vmem, vmem, vmem],
            out_specs=vmem,
        )(x, packed['w'], packed['a'], packed['r'])
        return jnp.swapaxes(out, 1, 2)                       # (B, seq_out, N)

    return forward


# -----------------------------------------------------------------------------
# Parameter init (mirrors the PyTorch module's parameter shapes)
# -----------------------------------------------------------------------------


def init_params(key, args, num_supports):
    Kt, tcn, gcn = args['Kt'], args['tcn_size'], args['gcn_size']
    N, S = args['num_nodes'], args['seq_output']
    t1 = S - 2 * (Kt - 1)
    t2 = t1 - 2 * (Kt - 1)
    keys = iter(jax.random.split(key, 64))

    def conv_w(cout, cin, kt):
        scale = 1.0 / math.sqrt(cin * kt)
        return jax.random.normal(next(keys), (cout, cin, kt), jnp.float32) * scale

    def conv_b(cout):
        return jax.random.normal(next(keys), (cout,), jnp.float32) * 0.01

    def gc_w(k, cin, cout):
        fan_in, fan_out = cin * cout, k * cout      # torch xavier fans for 3-D
        std = 1.414 * math.sqrt(2.0 / (fan_in + fan_out))
        return jax.random.normal(next(keys), (k, cin, cout), jnp.float32) * std

    def st_params(cin, t_out):
        return dict(
            t1_w1=conv_w(tcn, cin, Kt), t1_b1=conv_b(tcn),
            t1_w2=conv_w(tcn, cin, Kt), t1_b2=conv_b(tcn),
            gc_w=gc_w(num_supports, tcn, gcn),
            gc_b=jnp.zeros((gcn,), jnp.float32),
            t2_w1=conv_w(tcn, gcn, Kt), t2_b1=conv_b(tcn),
            t2_w2=conv_w(tcn, gcn, Kt), t2_b2=conv_b(tcn),
            ln_g=jnp.ones((tcn, N, t_out), jnp.float32),
            ln_b=jnp.zeros((tcn, N, t_out), jnp.float32),
        )

    return dict(
        st1=st_params(args['input_size'], t1),
        st2=st_params(tcn, t2),
        last=dict(w1=conv_w(tcn, tcn, t2), b1=conv_b(tcn),
                  w2=conv_w(tcn, tcn, t2), b2=conv_b(tcn)),
        out_w=jax.random.normal(next(keys), (S, tcn), jnp.float32)
        / math.sqrt(tcn),
        out_b=jax.random.normal(next(keys), (S,), jnp.float32) * 0.01,
    )


if __name__ == "__main__":
    key = jax.random.PRNGKey(0)
    k_inp, k_sup, k_par = jax.random.split(key, 3)

    B, T, N, F = 2, ARGS['seq_input'], ARGS['num_nodes'], ARGS['input_size']
    K = 2  # number of graph supports

    inputs = jax.random.normal(k_inp, (B, T, N, F), jnp.float32)
    supports = jax.random.uniform(k_sup, (K, N, N), jnp.float32)
    supports = supports / jnp.sum(supports, axis=-1, keepdims=True)

    params = init_params(k_par, ARGS, K)

    # One-time weight packing (hoisted out of the per-call forward).
    packed, meta = pack_params(params, supports, ARGS, batch=B)
    forward = build_forward(meta)

    out = forward(packed, inputs)
    out = jax.block_until_ready(out)

    assert out.shape == (B, ARGS['seq_output'], N), out.shape
    assert bool(jnp.all(jnp.isfinite(out)))
    print("KERNEL_OK")
</pallas_src>

<mosaic_0001>
module attributes {stable_mosaic.version = 11 : i64} {
  func.func @kernel(%arg0: memref<32x32xf32, #tpu.memory_space<vmem>>, %arg1: memref<1024x64xf32, #tpu.memory_space<vmem>>, %arg2: memref<64x32xf32, #tpu.memory_space<vmem>>, %arg3: memref<16x64xf32, #tpu.memory_space<vmem>>, %arg4: memref<2x16x8xf32, #tpu.memory_space<vmem>>) attributes {dimension_semantics = [], scalar_prefetch = 0 : i64, scratch_operands = 0 : i64, tpu.core_type = #tpu.core_type<tc>} {
    %c0 = arith.constant 0 : index
    %c0_0 = arith.constant 0 : index
    %0 = vector.load %arg3[%c0, %c0_0] : memref<16x64xf32, #tpu.memory_space<vmem>>, vector<16x64xf32>
    %c0_1 = arith.constant 0 : index
    %c0_2 = arith.constant 0 : index
    %1 = vector.load %arg0[%c0_1, %c0_2] : memref<32x32xf32, #tpu.memory_space<vmem>>, vector<32x32xf32>
    %c0_3 = arith.constant 0 : index
    %c0_4 = arith.constant 0 : index
    %2 = vector.load %arg1[%c0_3, %c0_4] : memref<1024x64xf32, #tpu.memory_space<vmem>>, vector<32x64xf32>
    %c32 = arith.constant 32 : index
    %c0_5 = arith.constant 0 : index
    %3 = vector.load %arg1[%c32, %c0_5] : memref<1024x64xf32, #tpu.memory_space<vmem>>, vector<32x64xf32>
    %cst = arith.constant dense<0.000000e+00> : vector<32x64xf32>
    %4 = tpu.matmul %1, %2, %cst {dimension_numbers = #tpu.dot_dimension_numbers<[1], [0], [0], [1], [0, 0, 1, 1], [], []>} : vector<32x32xf32>, vector<32x64xf32>, vector<32x64xf32> -> vector<32x64xf32>
    %5 = vector.extract_strided_slice %0 {offsets = [0, 0], sizes = [1, 64], strides = [1, 1]} : vector<16x64xf32> to vector<1x64xf32>
    %6 = vector.broadcast %5 : vector<1x64xf32> to vector<32x64xf32>
    %7 = arith.addf %4, %6 : vector<32x64xf32>
    %cst_6 = arith.constant dense<0.000000e+00> : vector<32x64xf32>
    %8 = tpu.matmul %1, %3, %cst_6 {dimension_numbers = #tpu.dot_dimension_numbers<[1], [0], [0], [1], [0, 0, 1, 1], [], []>} : vector<32x32xf32>, vector<32x64xf32>, vector<32x64xf32> -> vector<32x64xf32>
    %9 = vector.extract_strided_slice %0 {offsets = [1, 0], sizes = [1, 64], strides = [1, 1]} : vector<16x64xf32> to vector<1x64xf32>
    %10 = vector.broadcast %9 : vector<1x64xf32> to vector<32x64xf32>
    %11 = arith.addf %8, %10 : vector<32x64xf32>
    %cst_7 = arith.constant 5.000000e-01 : f32
    %12 = vector.broadcast %cst_7 : f32 to vector<32x64xf32>
    %13 = arith.mulf %12, %11 : vector<32x64xf32>
    %14 = math.tanh %13 : vector<32x64xf32>
    %cst_8 = arith.constant 5.000000e-01 : f32
    %15 = vector.broadcast %cst_8 : f32 to vector<32x64xf32>
    %16 = arith.mulf %15, %14 : vector<32x64xf32>
    %cst_9 = arith.constant 5.000000e-01 : f32
    %17 = vector.broadcast %cst_9 : f32 to vector<32x64xf32>
    %18 = arith.addf %16, %17 : vector<32x64xf32>
    %19 = arith.mulf %7, %18 : vector<32x64xf32>
    %c0_10 = arith.constant 0 : index
    %c0_11 = arith.constant 0 : index
    %20 = vector.load %arg2[%c0_10, %c0_11] : memref<64x32xf32, #tpu.memory_space<vmem>>, vector<32x32xf32>
    %cst_12 = arith.constant dense<0.000000e+00> : vector<32x64xf32>
    %21 = tpu.matmul %20, %19, %cst_12 {dimension_numbers = #tpu.dot_dimension_numbers<[1], [0], [0], [1], [0, 0, 1, 1], [], []>} : vector<32x32xf32>, vector<32x64xf32>, vector<32x64xf32> -> vector<32x64xf32>
    %c64 = arith.constant 64 : index
    %c0_13 = arith.constant 0 : index
    %22 = vector.load %arg1[%c64, %c0_13] : memref<1024x64xf32, #tpu.memory_space<vmem>>, vector<64x64xf32>
    %cst_14 = arith.constant dense<0.000000e+00> : vector<32x64xf32>
    %23 = tpu.matmul %21, %22, %cst_14 {dimension_numbers = #tpu.dot_dimension_numbers<[1], [0], [0], [1], [0, 0, 1, 1], [], []>} : vector<32x64xf32>, vector<64x64xf32>, vector<32x64xf32> -> vector<32x64xf32>
    %c32_15 = arith.constant 32 : index
    %c0_16 = arith.constant 0 : index
    %24 = vector.load %arg2[%c32_15, %c0_16] : memref<64x32xf32, #tpu.memory_space<vmem>>, vector<32x32xf32>
    %cst_17 = arith.constant dense<0.000000e+00> : vector<32x64xf32>
    %25 = tpu.matmul %24, %19, %cst_17 {dimension_numbers = #tpu.dot_dimension_numbers<[1], [0], [0], [1], [0, 0, 1, 1], [], []>} : vector<32x32xf32>, vector<32x64xf32>, vector<32x64xf32> -> vector<32x64xf32>
    %c128 = arith.constant 128 : index
    %c0_18 = arith.constant 0 : index
    %26 = vector.load %arg1[%c128, %c0_18] : memref<1024x64xf32, #tpu.memory_space<vmem>>, vector<64x64xf32>
    %cst_19 = arith.constant dense<0.000000e+00> : vector<32x64xf32>
    %27 = tpu.matmul %25, %26, %cst_19 {dimension_numbers = #tpu.dot_dimension_numbers<[1], [0], [0], [1], [0, 0, 1, 1], [], []>} : vector<32x64xf32>, vector<64x64xf32>, vector<32x64xf32> -> vector<32x64xf32>
    %28 = arith.addf %23, %27 : vector<32x64xf32>
    %29 = vector.extract_strided_slice %0 {offsets = [2, 0], sizes = [1, 64], strides = [1, 1]} : vector<16x64xf32> to vector<1x64xf32>
    %30 = vector.broadcast %29 : vector<1x64xf32> to vector<32x64xf32>
    %31 = arith.addf %28, %30 : vector<32x64xf32>
    %cst_20 = arith.constant 0.000000e+00 : f32
    %32 = vector.broadcast %cst_20 : f32 to vector<32x64xf32>
    %33 = arith.maximumf %31, %32 : vector<32x64xf32>
    %c192 = arith.constant 192 : index
    %c0_21 = arith.constant 0 : index
    %34 = vector.load %arg1[%c192, %c0_21] : memref<1024x64xf32, #tpu.memory_space<vmem>>, vector<64x64xf32>
    %c256 = arith.constant 256 : index
    %c0_22 = arith.constant 0 : index
    %35 = vector.load %arg1[%c256, %c0_22] : memref<1024x64xf32, #tpu.memory_space<vmem>>, vector<64x64xf32>
    %cst_23 = arith.constant dense<0.000000e+00> : vector<32x64xf32>
    %36 = tpu.matmul %33, %34, %cst_23 {dimension_numbers = #tpu.dot_dimension_numbers<[1], [0], [0], [1], [0, 0, 1, 1], [], []>} : vector<32x64xf32>, vector<64x64xf32>, vector<32x64xf32> -> vector<32x64xf32>
    %37 = vector.extract_strided_slice %0 {offsets = [3, 0], sizes = [1, 64], strides = [1, 1]} : vector<16x64xf32> to vector<1x64xf32>
    %38 = vector.broadcast %37 : vector<1x64xf32> to vector<32x64xf32>
    %39 = arith.addf %36, %38 : vector<32x64xf32>
    %cst_24 = arith.constant dense<0.000000e+00> : vector<32x64xf32>
    %40 = tpu.matmul %33, %35, %cst_24 {dimension_numbers = #tpu.dot_dimension_numbers<[1], [0], [0], [1], [0, 0, 1, 1], [], []>} : vector<32x64xf32>, vector<64x64xf32>, vector<32x64xf32> -> vector<32x64xf32>
    %41 = vector.extract_strided_slice %0 {offsets = [4, 0], sizes = [1, 64], strides = [1, 1]} : vector<16x64xf32> to vector<1x64xf32>
    %42 = vector.broadcast %41 : vector<1x64xf32> to vector<32x64xf32>
    %43 = arith.addf %40, %42 : vector<32x64xf32>
    %cst_25 = arith.constant 5.000000e-01 : f32
    %44 = vector.broadcast %cst_25 : f32 to vector<32x64xf32>
    %45 = arith.mulf %44, %43 : vector<32x64xf32>
    %46 = math.tanh %45 : vector<32x64xf32>
    %cst_26 = arith.constant 5.000000e-01 : f32
    %47 = vector.broadcast %cst_26 : f32 to vector<32x64xf32>
    %48 = arith.mulf %47, %46 : vector<32x64xf32>
    %cst_27 = arith.constant 5.000000e-01 : f32
    %49 = vector.broadcast %cst_27 : f32 to vector<32x64xf32>
    %50 = arith.addf %48, %49 : vector<32x64xf32>
    %51 = arith.mulf %39, %50 : vector<32x64xf32>
    %52 = vector.extract_strided_slice %0 {offsets = [5, 0], sizes = [1, 64], strides = [1, 1]} : vector<16x64xf32> to vector<1x64xf32>
    %53 = vector.extract_strided_slice %51 {offsets = [0, 0], sizes = [16, 64], strides = [1, 1]} : vector<32x64xf32> to vector<16x64xf32>
    %54 = vector.broadcast %52 : vector<1x64xf32> to vector<16x64xf32>
    %55 = arith.mulf %53, %54 : vector<16x64xf32>
    %cst_28 = arith.constant dense<0.000000e+00> : vector<16xf32>
    %56 = vector.multi_reduction <add>, %55, %cst_28 [1] : vector<16x64xf32> to vector<16xf32>
    %57 = vector.shape_cast %56 : vector<16xf32> to vector<16x1xf32>
    %cst_29 = arith.constant dense<0.000000e+00> : vector<1xf32>
    %58 = vector.multi_reduction <add>, %57, %cst_29 [0] : vector<16x1xf32> to vector<1xf32>
    %59 = vector.shape_cast %58 : vector<1xf32> to vector<1x1xf32>
    %60 = arith.mulf %55, %55 : vector<16x64xf32>
    %cst_30 = arith.constant dense<0.000000e+00> : vector<16xf32>
    %61 = vector.multi_reduction <add>, %60, %cst_30 [1] : vector<16x64xf32> to vector<16xf32>
    %62 = vector.shape_cast %61 : vector<16xf32> to vector<16x1xf32>
    %cst_31 = arith.constant dense<0.000000e+00> : vector<1xf32>
    %63 = vector.multi_reduction <add>, %62, %cst_31 [0] : vector<16x1xf32> to vector<1xf32>
    %64 = vector.shape_cast %63 : vector<1xf32> to vector<1x1xf32>
    %cst_32 = arith.constant 0.00130208337 : f32
    %65 = vector.broadcast %cst_32 : f32 to vector<1x1xf32>
    %66 = arith.mulf %59, %65 : vector<1x1xf32>
    %cst_33 = arith.constant 0.00130208337 : f32
    %67 = vector.broadcast %cst_33 : f32 to vector<1x1xf32>
    %68 = arith.mulf %64, %67 : vector<1x1xf32>
    %69 = arith.mulf %66, %66 : vector<1x1xf32>
    %70 = arith.subf %68, %69 : vector<1x1xf32>
    %cst_34 = arith.constant 0.000000e+00 : f32
    %71 = vector.broadcast %cst_34 : f32 to vector<1x1xf32>
    %72 = arith.maximumf %70, %71 : vector<1x1xf32>
    %73 = vector.broadcast %66 : vector<1x1xf32> to vector<16x64xf32>
    %74 = arith.subf %53, %73 : vector<16x64xf32>
    %cst_35 = arith.constant 9.99999974E-6 : f32
    %75 = vector.broadcast %cst_35 : f32 to vector<1x1xf32>
    %76 = arith.addf %72, %75 : vector<1x1xf32>
    %77 = math.rsqrt %76 : vector<1x1xf32>
    %78 = vector.broadcast %77 : vector<1x1xf32> to vector<16x64xf32>
    %79 = arith.mulf %74, %78 : vector<16x64xf32>
    %80 = vector.extract_strided_slice %51 {offsets = [16, 0], sizes = [16, 64], strides = [1, 1]} : vector<32x64xf32> to vector<16x64xf32>
    %81 = vector.broadcast %52 : vector<1x64xf32> to vector<16x64xf32>
    %82 = arith.mulf %80, %81 : vector<16x64xf32>
    %cst_36 = arith.constant dense<0.000000e+00> : vector<16xf32>
    %83 = vector.multi_reduction <add>, %82, %cst_36 [1] : vector<16x64xf32> to vector<16xf32>
    %84 = vector.shape_cast %83 : vector<16xf32> to vector<16x1xf32>
    %cst_37 = arith.constant dense<0.000000e+00> : vector<1xf32>
    %85 = vector.multi_reduction <add>, %84, %cst_37 [0] : vector<16x1xf32> to vector<1xf32>
    %86 = vector.shape_cast %85 : vector<1xf32> to vector<1x1xf32>
    %87 = arith.mulf %82, %82 : vector<16x64xf32>
    %cst_38 = arith.constant dense<0.000000e+00> : vector<16xf32>
    %88 = vector.multi_reduction <add>, %87, %cst_38 [1] : vector<16x64xf32> to vector<16xf32>
    %89 = vector.shape_cast %88 : vector<16xf32> to vector<16x1xf32>
    %cst_39 = arith.constant dense<0.000000e+00> : vector<1xf32>
    %90 = vector.multi_reduction <add>, %89, %cst_39 [0] : vector<16x1xf32> to vector<1xf32>
    %91 = vector.shape_cast %90 : vector<1xf32> to vector<1x1xf32>
    %cst_40 = arith.constant 0.00130208337 : f32
    %92 = vector.broadcast %cst_40 : f32 to vector<1x1xf32>
    %93 = arith.mulf %86, %92 : vector<1x1xf32>
    %cst_41 = arith.constant 0.00130208337 : f32
    %94 = vector.broadcast %cst_41 : f32 to vector<1x1xf32>
    %95 = arith.mulf %91, %94 : vector<1x1xf32>
    %96 = arith.mulf %93, %93 : vector<1x1xf32>
    %97 = arith.subf %95, %96 : vector<1x1xf32>
    %cst_42 = arith.constant 0.000000e+00 : f32
    %98 = vector.broadcast %cst_42 : f32 to vector<1x1xf32>
    %99 = arith.maximumf %97, %98 : vector<1x1xf32>
    %100 = vector.broadcast %93 : vector<1x1xf32> to vector<16x64xf32>
    %101 = arith.subf %80, %100 : vector<16x64xf32>
    %cst_43 = arith.constant 9.99999974E-6 : f32
    %102 = vector.broadcast %cst_43 : f32 to vector<1x1xf32>
    %103 = arith.addf %99, %102 : vector<1x1xf32>
    %104 = math.rsqrt %103 : vector<1x1xf32>
    %105 = vector.broadcast %104 : vector<1x1xf32> to vector<16x64xf32>
    %106 = arith.mulf %101, %105 : vector<16x64xf32>
    %107 = tpu.concatenate %79, %106 in 0 : vector<16x64xf32>, vector<16x64xf32> -> vector<32x64xf32>
    %c320 = arith.constant 320 : index
    %c0_44 = arith.constant 0 : index
    %108 = vector.load %arg1[%c320, %c0_44] : memref<1024x64xf32, #tpu.memory_space<vmem>>, vector<32x64xf32>
    %109 = arith.mulf %107, %108 : vector<32x64xf32>
    %c352 = arith.constant 352 : index
    %c0_45 = arith.constant 0 : index
    %110 = vector.load %arg1[%c352, %c0_45] : memref<1024x64xf32, #tpu.memory_space<vmem>>, vector<32x64xf32>
    %111 = arith.addf %109, %110 : vector<32x64xf32>
    %c384 = arith.constant 384 : index
    %c0_46 = arith.constant 0 : index
    %112 = vector.load %arg1[%c384, %c0_46] : memref<1024x64xf32, #tpu.memory_space<vmem>>, vector<64x64xf32>
    %c448 = arith.constant 448 : index
    %c0_47 = arith.constant 0 : index
    %113 = vector.load %arg1[%c448, %c0_47] : memref<1024x64xf32, #tpu.memory_space<vmem>>, vector<64x64xf32>
    %cst_48 = arith.constant dense<0.000000e+00> : vector<32x64xf32>
    %114 = tpu.matmul %111, %112, %cst_48 {dimension_numbers = #tpu.dot_dimension_numbers<[1], [0], [0], [1], [0, 0, 1, 1], [], []>} : vector<32x64xf32>, vector<64x64xf32>, vector<32x64xf32> -> vector<32x64xf32>
    %115 = vector.extract_strided_slice %0 {offsets = [6, 0], sizes = [1, 64], strides = [1, 1]} : vector<16x64xf32> to vector<1x64xf32>
    %116 = vector.broadcast %115 : vector<1x64xf32> to vector<32x64xf32>
    %117 = arith.addf %114, %116 : vector<32x64xf32>
    %cst_49 = arith.constant dense<0.000000e+00> : vector<32x64xf32>
    %118 = tpu.matmul %111, %113, %cst_49 {dimension_numbers = #tpu.dot_dimension_numbers<[1], [0], [0], [1], [0, 0, 1, 1], [], []>} : vector<32x64xf32>, vector<64x64xf32>, vector<32x64xf32> -> vector<32x64xf32>
    %119 = vector.extract_strided_slice %0 {offsets = [7, 0], sizes = [1, 64], strides = [1, 1]} : vector<16x64xf32> to vector<1x64xf32>
    %120 = vector.broadcast %119 : vector<1x64xf32> to vector<32x64xf32>
    %121 = arith.addf %118, %120 : vector<32x64xf32>
    %cst_50 = arith.constant 5.000000e-01 : f32
    %122 = vector.broadcast %cst_50 : f32 to vector<32x64xf32>
    %123 = arith.mulf %122, %121 : vector<32x64xf32>
    %124 = math.tanh %123 : vector<32x64xf32>
    %cst_51 = arith.constant 5.000000e-01 : f32
    %125 = vector.broadcast %cst_51 : f32 to vector<32x64xf32>
    %126 = arith.mulf %125, %124 : vector<32x64xf32>
    %cst_52 = arith.constant 5.000000e-01 : f32
    %127 = vector.broadcast %cst_52 : f32 to vector<32x64xf32>
    %128 = arith.addf %126, %127 : vector<32x64xf32>
    %129 = arith.mulf %117, %128 : vector<32x64xf32>
    %c0_53 = arith.constant 0 : index
    %c0_54 = arith.constant 0 : index
    %130 = vector.load %arg2[%c0_53, %c0_54] : memref<64x32xf32, #tpu.memory_space<vmem>>, vector<32x32xf32>
    %cst_55 = arith.constant dense<0.000000e+00> : vector<32x64xf32>
    %131 = tpu.matmul %130, %129, %cst_55 {dimension_numbers = #tpu.dot_dimension_numbers<[1], [0], [0], [1], [0, 0, 1, 1], [], []>} : vector<32x32xf32>, vector<32x64xf32>, vector<32x64xf32> -> vector<32x64xf32>
    %c512 = arith.constant 512 : index
    %c0_56 = arith.constant 0 : index
    %132 = vector.load %arg1[%c512, %c0_56] : memref<1024x64xf32, #tpu.memory_space<vmem>>, vector<64x64xf32>
    %cst_57 = arith.constant dense<0.000000e+00> : vector<32x64xf32>
    %133 = tpu.matmul %131, %132, %cst_57 {dimension_numbers = #tpu.dot_dimension_numbers<[1], [0], [0], [1], [0, 0, 1, 1], [], []>} : vector<32x64xf32>, vector<64x64xf32>, vector<32x64xf32> -> vector<32x64xf32>
    %c32_58 = arith.constant 32 : index
    %c0_59 = arith.constant 0 : index
    %134 = vector.load %arg2[%c32_58, %c0_59] : memref<64x32xf32, #tpu.memory_space<vmem>>, vector<32x32xf32>
    %cst_60 = arith.constant dense<0.000000e+00> : vector<32x64xf32>
    %135 = tpu.matmul %134, %129, %cst_60 {dimension_numbers = #tpu.dot_dimension_numbers<[1], [0], [0], [1], [0, 0, 1, 1], [], []>} : vector<32x32xf32>, vector<32x64xf32>, vector<32x64xf32> -> vector<32x64xf32>
    %c576 = arith.constant 576 : index
    %c0_61 = arith.constant 0 : index
    %136 = vector.load %arg1[%c576, %c0_61] : memref<1024x64xf32, #tpu.memory_space<vmem>>, vector<64x64xf32>
    %cst_62 = arith.constant dense<0.000000e+00> : vector<32x64xf32>
    %137 = tpu.matmul %135, %136, %cst_62 {dimension_numbers = #tpu.dot_dimension_numbers<[1], [0], [0], [1], [0, 0, 1, 1], [], []>} : vector<32x64xf32>, vector<64x64xf32>, vector<32x64xf32> -> vector<32x64xf32>
    %138 = arith.addf %133, %137 : vector<32x64xf32>
    %139 = vector.extract_strided_slice %0 {offsets = [8, 0], sizes = [1, 64], strides = [1, 1]} : vector<16x64xf32> to vector<1x64xf32>
    %140 = vector.broadcast %139 : vector<1x64xf32> to vector<32x64xf32>
    %141 = arith.addf %138, %140 : vector<32x64xf32>
    %cst_63 = arith.constant 0.000000e+00 : f32
    %142 = vector.broadcast %cst_63 : f32 to vector<32x64xf32>
    %143 = arith.maximumf %141, %142 : vector<32x64xf32>
    %c640 = arith.constant 640 : index
    %c0_64 = arith.constant 0 : index
    %144 = vector.load %arg1[%c640, %c0_64] : memref<1024x64xf32, #tpu.memory_space<vmem>>, vector<64x64xf32>
    %c704 = arith.constant 704 : index
    %c0_65 = arith.constant 0 : index
    %145 = vector.load %arg1[%c704, %c0_65] : memref<1024x64xf32, #tpu.memory_space<vmem>>, vector<64x64xf32>
    %cst_66 = arith.constant dense<0.000000e+00> : vector<32x64xf32>
    %146 = tpu.matmul %143, %144, %cst_66 {dimension_numbers = #tpu.dot_dimension_numbers<[1], [0], [0], [1], [0, 0, 1, 1], [], []>} : vector<32x64xf32>, vector<64x64xf32>, vector<32x64xf32> -> vector<32x64xf32>
    %147 = vector.extract_strided_slice %0 {offsets = [9, 0], sizes = [1, 64], strides = [1, 1]} : vector<16x64xf32> to vector<1x64xf32>
    %148 = vector.broadcast %147 : vector<1x64xf32> to vector<32x64xf32>
    %149 = arith.addf %146, %148 : vector<32x64xf32>
    %cst_67 = arith.constant dense<0.000000e+00> : vector<32x64xf32>
    %150 = tpu.matmul %143, %145, %cst_67 {dimension_numbers = #tpu.dot_dimension_numbers<[1], [0], [0], [1], [0, 0, 1, 1], [], []>} : vector<32x64xf32>, vector<64x64xf32>, vector<32x64xf32> -> vector<32x64xf32>
    %151 = vector.extract_strided_slice %0 {offsets = [10, 0], sizes = [1, 64], strides = [1, 1]} : vector<16x64xf32> to vector<1x64xf32>
    %152 = vector.broadcast %151 : vector<1x64xf32> to vector<32x64xf32>
    %153 = arith.addf %150, %152 : vector<32x64xf32>
    %cst_68 = arith.constant 5.000000e-01 : f32
    %154 = vector.broadcast %cst_68 : f32 to vector<32x64xf32>
    %155 = arith.mulf %154, %153 : vector<32x64xf32>
    %156 = math.tanh %155 : vector<32x64xf32>
    %cst_69 = arith.constant 5.000000e-01 : f32
    %157 = vector.broadcast %cst_69 : f32 to vector<32x64xf32>
    %158 = arith.mulf %157, %156 : vector<32x64xf32>
    %cst_70 = arith.constant 5.000000e-01 : f32
    %159 = vector.broadcast %cst_70 : f32 to vector<32x64xf32>
    %160 = arith.addf %158, %159 : vector<32x64xf32>
    %161 = arith.mulf %149, %160 : vector<32x64xf32>
    %162 = vector.extract_strided_slice %0 {offsets = [11, 0], sizes = [1, 64], strides = [1, 1]} : vector<16x64xf32> to vector<1x64xf32>
    %163 = vector.extract_strided_slice %161 {offsets = [0, 0], sizes = [16, 64], strides = [1, 1]} : vector<32x64xf32> to vector<16x64xf32>
    %164 = vector.broadcast %162 : vector<1x64xf32> to vector<16x64xf32>
    %165 = arith.mulf %163, %164 : vector<16x64xf32>
    %cst_71 = arith.constant dense<0.000000e+00> : vector<16xf32>
    %166 = vector.multi_reduction <add>, %165, %cst_71 [1] : vector<16x64xf32> to vector<16xf32>
    %167 = vector.shape_cast %166 : vector<16xf32> to vector<16x1xf32>
    %cst_72 = arith.constant dense<0.000000e+00> : vector<1xf32>
    %168 = vector.multi_reduction <add>, %167, %cst_72 [0] : vector<16x1xf32> to vector<1xf32>
    %169 = vector.shape_cast %168 : vector<1xf32> to vector<1x1xf32>
    %170 = arith.mulf %165, %165 : vector<16x64xf32>
    %cst_73 = arith.constant dense<0.000000e+00> : vector<16xf32>
    %171 = vector.multi_reduction <add>, %170, %cst_73 [1] : vector<16x64xf32> to vector<16xf32>
    %172 = vector.shape_cast %171 : vector<16xf32> to vector<16x1xf32>
    %cst_74 = arith.constant dense<0.000000e+00> : vector<1xf32>
    %173 = vector.multi_reduction <add>, %172, %cst_74 [0] : vector<16x1xf32> to vector<1xf32>
    %174 = vector.shape_cast %173 : vector<1xf32> to vector<1x1xf32>
    %cst_75 = arith.constant 0.001953125 : f32
    %175 = vector.broadcast %cst_75 : f32 to vector<1x1xf32>
    %176 = arith.mulf %169, %175 : vector<1x1xf32>
    %cst_76 = arith.constant 0.001953125 : f32
    %177 = vector.broadcast %cst_76 : f32 to vector<1x1xf32>
    %178 = arith.mulf %174, %177 : vector<1x1xf32>
    %179 = arith.mulf %176, %176 : vector<1x1xf32>
    %180 = arith.subf %178, %179 : vector<1x1xf32>
    %cst_77 = arith.constant 0.000000e+00 : f32
    %181 = vector.broadcast %cst_77 : f32 to vector<1x1xf32>
    %182 = arith.maximumf %180, %181 : vector<1x1xf32>
    %183 = vector.broadcast %176 : vector<1x1xf32> to vector<16x64xf32>
    %184 = arith.subf %163, %183 : vector<16x64xf32>
    %cst_78 = arith.constant 9.99999974E-6 : f32
    %185 = vector.broadcast %cst_78 : f32 to vector<1x1xf32>
    %186 = arith.addf %182, %185 : vector<1x1xf32>
    %187 = math.rsqrt %186 : vector<1x1xf32>
    %188 = vector.broadcast %187 : vector<1x1xf32> to vector<16x64xf32>
    %189 = arith.mulf %184, %188 : vector<16x64xf32>
    %190 = vector.extract_strided_slice %161 {offsets = [16, 0], sizes = [16, 64], strides = [1, 1]} : vector<32x64xf32> to vector<16x64xf32>
    %191 = vector.broadcast %162 : vector<1x64xf32> to vector<16x64xf32>
    %192 = arith.mulf %190, %191 : vector<16x64xf32>
    %cst_79 = arith.constant dense<0.000000e+00> : vector<16xf32>
    %193 = vector.multi_reduction <add>, %192, %cst_79 [1] : vector<16x64xf32> to vector<16xf32>
    %194 = vector.shape_cast %193 : vector<16xf32> to vector<16x1xf32>
    %cst_80 = arith.constant dense<0.000000e+00> : vector<1xf32>
    %195 = vector.multi_reduction <add>, %194, %cst_80 [0] : vector<16x1xf32> to vector<1xf32>
    %196 = vector.shape_cast %195 : vector<1xf32> to vector<1x1xf32>
    %197 = arith.mulf %192, %192 : vector<16x64xf32>
    %cst_81 = arith.constant dense<0.000000e+00> : vector<16xf32>
    %198 = vector.multi_reduction <add>, %197, %cst_81 [1] : vector<16x64xf32> to vector<16xf32>
    %199 = vector.shape_cast %198 : vector<16xf32> to vector<16x1xf32>
    %cst_82 = arith.constant dense<0.000000e+00> : vector<1xf32>
    %200 = vector.multi_reduction <add>, %199, %cst_82 [0] : vector<16x1xf32> to vector<1xf32>
    %201 = vector.shape_cast %200 : vector<1xf32> to vector<1x1xf32>
    %cst_83 = arith.constant 0.001953125 : f32
    %202 = vector.broadcast %cst_83 : f32 to vector<1x1xf32>
    %203 = arith.mulf %196, %202 : vector<1x1xf32>
    %cst_84 = arith.constant 0.001953125 : f32
    %204 = vector.broadcast %cst_84 : f32 to vector<1x1xf32>
    %205 = arith.mulf %201, %204 : vector<1x1xf32>
    %206 = arith.mulf %203, %203 : vector<1x1xf32>
    %207 = arith.subf %205, %206 : vector<1x1xf32>
    %cst_85 = arith.constant 0.000000e+00 : f32
    %208 = vector.broadcast %cst_85 : f32 to vector<1x1xf32>
    %209 = arith.maximumf %207, %208 : vector<1x1xf32>
    %210 = vector.broadcast %203 : vector<1x1xf32> to vector<16x64xf32>
    %211 = arith.subf %190, %210 : vector<16x64xf32>
    %cst_86 = arith.constant 9.99999974E-6 : f32
    %212 = vector.broadcast %cst_86 : f32 to vector<1x1xf32>
    %213 = arith.addf %209, %212 : vector<1x1xf32>
    %214 = math.rsqrt %213 : vector<1x1xf32>
    %215 = vector.broadcast %214 : vector<1x1xf32> to vector<16x64xf32>
    %216 = arith.mulf %211, %215 : vector<16x64xf32>
    %217 = tpu.concatenate %189, %216 in 0 : vector<16x64xf32>, vector<16x64xf32> -> vector<32x64xf32>
    %c768 = arith.constant 768 : index
    %c0_87 = arith.constant 0 : index
    %218 = vector.load %arg1[%c768, %c0_87] : memref<1024x64xf32, #tpu.memory_space<vmem>>, vector<32x64xf32>
    %219 = arith.mulf %217, %218 : vector<32x64xf32>
    %c800 = arith.constant 800 : index
    %c0_88 = arith.constant 0 : index
    %220 = vector.load %arg1[%c800, %c0_88] : memref<1024x64xf32, #tpu.memory_space<vmem>>, vector<32x64xf32>
    %221 = arith.addf %219, %220 : vector<32x64xf32>
    %c832 = arith.constant 832 : index
    %c0_89 = arith.constant 0 : index
    %222 = vector.load %arg1[%c832, %c0_89] : memref<1024x64xf32, #tpu.memory_space<vmem>>, vector<64x64xf32>
    %c896 = arith.constant 896 : index
    %c0_90 = arith.constant 0 : index
    %223 = vector.load %arg1[%c896, %c0_90] : memref<1024x64xf32, #tpu.memory_space<vmem>>, vector<64x64xf32>
    %cst_91 = arith.constant dense<0.000000e+00> : vector<32x64xf32>
    %224 = tpu.matmul %221, %222, %cst_91 {dimension_numbers = #tpu.dot_dimension_numbers<[1], [0], [0], [1], [0, 0, 1, 1], [], []>} : vector<32x64xf32>, vector<64x64xf32>, vector<32x64xf32> -> vector<32x64xf32>
    %225 = vector.extract_strided_slice %0 {offsets = [12, 0], sizes = [1, 64], strides = [1, 1]} : vector<16x64xf32> to vector<1x64xf32>
    %226 = vector.broadcast %225 : vector<1x64xf32> to vector<32x64xf32>
    %227 = arith.addf %224, %226 : vector<32x64xf32>
    %cst_92 = arith.constant dense<0.000000e+00> : vector<32x64xf32>
    %228 = tpu.matmul %221, %223, %cst_92 {dimension_numbers = #tpu.dot_dimension_numbers<[1], [0], [0], [1], [0, 0, 1, 1], [], []>} : vector<32x64xf32>, vector<64x64xf32>, vector<32x64xf32> -> vector<32x64xf32>
    %229 = vector.extract_strided_slice %0 {offsets = [13, 0], sizes = [1, 64], strides = [1, 1]} : vector<16x64xf32> to vector<1x64xf32>
    %230 = vector.broadcast %229 : vector<1x64xf32> to vector<32x64xf32>
    %231 = arith.addf %228, %230 : vector<32x64xf32>
    %cst_93 = arith.constant 5.000000e-01 : f32
    %232 = vector.broadcast %cst_93 : f32 to vector<32x64xf32>
    %233 = arith.mulf %232, %231 : vector<32x64xf32>
    %234 = math.tanh %233 : vector<32x64xf32>
    %cst_94 = arith.constant 5.000000e-01 : f32
    %235 = vector.broadcast %cst_94 : f32 to vector<32x64xf32>
    %236 = arith.mulf %235, %234 : vector<32x64xf32>
    %cst_95 = arith.constant 5.000000e-01 : f32
    %237 = vector.broadcast %cst_95 : f32 to vector<32x64xf32>
    %238 = arith.addf %236, %237 : vector<32x64xf32>
    %239 = arith.mulf %227, %238 : vector<32x64xf32>
    %c960 = arith.constant 960 : index
    %c0_96 = arith.constant 0 : index
    %240 = vector.load %arg1[%c960, %c0_96] : memref<1024x64xf32, #tpu.memory_space<vmem>>, vector<64x64xf32>
    %cst_97 = arith.constant dense<0.000000e+00> : vector<32x64xf32>
    %241 = tpu.matmul %239, %240, %cst_97 {dimension_numbers = #tpu.dot_dimension_numbers<[1], [0], [0], [1], [0, 0, 1, 1], [], []>} : vector<32x64xf32>, vector<64x64xf32>, vector<32x64xf32> -> vector<32x64xf32>
    %242 = vector.extract_strided_slice %0 {offsets = [14, 0], sizes = [1, 64], strides = [1, 1]} : vector<16x64xf32> to vector<1x64xf32>
    %243 = vector.broadcast %242 : vector<1x64xf32> to vector<32x64xf32>
    %244 = arith.addf %241, %243 : vector<32x64xf32>
    %245 = vector.extract_strided_slice %244 {offsets = [0, 0], sizes = [16, 8], strides = [1, 1]} : vector<32x64xf32> to vector<16x8xf32>
    %c0_98 = arith.constant 0 : index
    %c0_99 = arith.constant 0 : index
    %c0_100 = arith.constant 0 : index
    %246 = vector.load %arg4[%c0_98, %c0_99, %c0_100] : memref<2x16x8xf32, #tpu.memory_space<vmem>>, vector<1x16x8xf32>
    %247 = vector.shape_cast %246 : vector<1x16x8xf32> to vector<16x8xf32>
    %248 = vector.shape_cast %245 : vector<16x8xf32> to vector<1x16x8xf32>
    tpu.vector_store %arg4[%c0_98, %c0_99, %c0_100], %248 {strides = array<i32>} : memref<2x16x8xf32, #tpu.memory_space<vmem>>, vector<1x16x8xf32>,
    %249 = vector.extract_strided_slice %244 {offsets = [16, 0], sizes = [16, 8], strides = [1, 1]} : vector<32x64xf32> to vector<16x8xf32>
    %c1 = arith.constant 1 : index
    %c0_101 = arith.constant 0 : index
    %c0_102 = arith.constant 0 : index
    %250 = vector.load %arg4[%c1, %c0_101, %c0_102] : memref<2x16x8xf32, #tpu.memory_space<vmem>>, vector<1x16x8xf32>
    %251 = vector.shape_cast %250 : vector<1x16x8xf32> to vector<16x8xf32>
    %252 = vector.shape_cast %249 : vector<16x8xf32> to vector<1x16x8xf32>
    tpu.vector_store %arg4[%c1, %c0_101, %c0_102], %252 {strides = array<i32>} : memref<2x16x8xf32, #tpu.memory_space<vmem>>, vector<1x16x8xf32>,
    return
  }
}

</mosaic_0001>

<llo_original>
// kernel: forward.1
$region0: #{forward.1}
  #allocation0 [shape = 'u32[]', space=smem, size = 0x4, offset = 0x4, fixed_abs, tag = 'smem constant byte address 0x4 - core index']
  #allocation1 [shape = 'u32[144,128]{1,0:T(1,128)}', space=vmem, size = 0x12000, scoped, tag = 'internal scratch']
  %s0 = inlined_call_operand.vmem [shape: f32[32,32], index: 0, kind: input, shape index: {}]
  %s1 = inlined_call_operand.vmem [shape: f32[1024,64], index: 1, kind: input, shape index: {}]
  %s2 = inlined_call_operand.vmem [shape: f32[64,32], index: 2, kind: input, shape index: {}]
  %s3 = inlined_call_operand.vmem [shape: f32[16,64], index: 3, kind: input, shape index: {}]
  %s4 = inlined_call_operand.vmem [shape: f32[2,16,8], index: 4, kind: output, shape index: {}]
  %s5 = sld [smem:[#allocation0]]
  $region26: #{forward.1} parent=0
    _
  %s7 = ssub.s32 1, %s5
  %s8 = scalar_select 0, %s7, %s5
  // Predicated region
  $region2: #{forward.1} parent=0 // pred_check
    _
  $region3: #{forward.1} parent=0 // pred_check_branch
    %10 = sbr.rel (0) target = $region5
  $region4: #{forward.1} parent=0 // pred_region
    _
  $region5: #{forward.1} parent=0 // pred_fallthru
    _
  // Predicated region
  $region6: #{forward.1} parent=0 // pred_check
    _
  $region7: #{forward.1} parent=0 // pred_check_branch
    %12 = sbr.rel (0) target = $region9
  $region8: #{forward.1} parent=0 // pred_region
    _
  $region9: #{forward.1} parent=0 // pred_fallthru
    _
  // Predicated region
  $region10: #{forward.1} parent=0 // pred_check
    _
  $region11: #{forward.1} parent=0 // pred_check_branch
    %14 = sbr.rel (0) target = $region13
  $region12: #{forward.1} parent=0 // pred_region
    _
  $region13: #{forward.1} parent=0 // pred_fallthru
    _
  // Predicated region
  $region14: #{forward.1} parent=0 // pred_check
    _
  $region15: #{forward.1} parent=0 // pred_check_branch
    %16 = sbr.rel (0) target = $region17
  $region16: #{forward.1} parent=0 // pred_region
    _
  $region17: #{forward.1} parent=0 // pred_fallthru
    _
  %v17 = vld [vmem:[%s3] sm:$0xff]
  %v18 = vld [vmem:[%s3 + $0x8] sm:$0xff]
  %v19 = vld [vmem:[%s0] sm:$0xff]
  %v20 = vld [vmem:[%s0 + $0x8] sm:$0xff]
  %v21 = vld [vmem:[%s0 + $0x10] sm:$0xff]
  %v22 = vld [vmem:[%s0 + $0x18] sm:$0xff]
  %v23 = vld [vmem:[%s1] sm:$0xff]
  %v24 = vld [vmem:[%s1 + $0x8] sm:$0xff]
  %v25 = vld [vmem:[%s1 + $0x10] sm:$0xff]
  %v26 = vld [vmem:[%s1 + $0x18] sm:$0xff]
  %v27 = vld [vmem:[%s1 + $0x20] sm:$0xff]
  %v28 = vld [vmem:[%s1 + $0x28] sm:$0xff]
  %v29 = vld [vmem:[%s1 + $0x30] sm:$0xff]
  %v30 = vld [vmem:[%s1 + $0x38] sm:$0xff]
  %v31 = vlaneseq
  %v32 = vshrl.u32 %v31, 7
  %v33 = vsub.s32 0, %v32
  %v34 = vrot.slane %v17, %v33
  %vm35 = vcmask 261120
  %v37 = vsel %vm35, %v19, 0
  %v40 = vsel %vm35, %v20, 0
  %v43 = vsel %vm35, %v21, 0
  %v46 = vsel %vm35, %v22, 0
  %48 = vmatprep.subr.mxu0 0.0
  %49 = vmatpush1.msra.mxu0 %v23
  %50 = vmatprep.subr.mxu0 0.0
  %51 = vmatpush1.msra.mxu0 %v24
  %52 = vmatprep.subr.mxu0 0.0
  %53 = vmatpush1.msra.mxu0 %v25
  %54 = vmatprep.subr.mxu0 0.0
  %55 = vmatpush1.msra.mxu0 %v26
  %56 = vmatprep.subr.mxu0 0.0
  %57 = vmatpush1.msra.mxu0 0.0
  %58 = vmatprep.subr.mxu0 0.0
  %59 = vmatpush1.msra.mxu0 0.0
  %60 = vmatprep.subr.mxu0 0.0
  %61 = vmatpush1.msra.mxu0 0.0
  %62 = vmatprep.subr.mxu0 0.0
  %63 = vmatpush1.msra.mxu0 0.0
  %64 = vmatprep.subr.mxu0 0.0
  %65 = vmatpush1.msra.mxu0 0.0
  %66 = vmatprep.subr.mxu0 0.0
  %67 = vmatpush1.msra.mxu0 0.0
  %68 = vmatprep.subr.mxu0 0.0
  %69 = vmatpush1.msra.mxu0 0.0
  %70 = vmatprep.subr.mxu0 0.0
  %71 = vmatpush1.msra.mxu0 0.0
  %72 = vmatprep.subr.mxu0 0.0
  %73 = vmatpush1.msra.mxu0 0.0
  %74 = vmatprep.subr.mxu0 0.0
  %75 = vmatpush1.msra.mxu0 0.0
  %76 = vmatprep.subr.mxu0 0.0
  %77 = vmatpush1.msra.mxu0 0.0
  %78 = vmatprep.subr.mxu0 0.0
  %79 = vmatpush1.msra.mxu0 0.0
  %80 = vmatprep.subr.mxu0 0.0
  %81 = vmatpush1.msra.mxu0 0.0
  %82 = vmatprep.subr.mxu0 0.0
  %83 = vmatpush1.msra.mxu0 0.0
  %84 = vmatprep.subr.mxu0 0.0
  %85 = vmatpush1.msra.mxu0 0.0
  %86 = vmatprep.subr.mxu0 0.0
  %87 = vmatpush1.msra.mxu0 0.0
  %88 = vmatprep.subr.mxu0 0.0
  %89 = vmatpush1.msra.mxu0 0.0
  %90 = vmatprep.subr.mxu0 0.0
  %91 = vmatpush1.msra.mxu0 0.0
  %92 = vmatprep.subr.mxu0 0.0
  %93 = vmatpush1.msra.mxu0 0.0
  %94 = vmatprep.subr.mxu0 0.0
  %95 = vmatpush1.msra.mxu0 0.0
  %96 = vmatprep.subr.mxu0 0.0
  %97 = vmatpush1.msra.mxu0 0.0
  %98 = vmatprep.subr.mxu0 0.0
  %99 = vmatpush1.msra.mxu0 0.0
  %100 = vmatprep.subr.mxu0 0.0
  %101 = vmatpush1.msra.mxu0 0.0
  %102 = vmatprep.subr.mxu0 0.0
  %103 = vmatpush1.msra.mxu0 0.0
  %104 = vmatprep.subr.mxu0 0.0
  %105 = vmatpush1.msra.mxu0 0.0
  %106 = vmatprep.subr.mxu0 0.0
  %107 = vmatpush1.msra.mxu0 0.0
  %108 = vmatprep.subr.mxu0 0.0
  %109 = vmatpush1.msra.mxu0 0.0
  %110 = vmatprep.subr.mxu0 0.0
  %111 = vmatpush1.msra.mxu0 0.0
  %112 = vmatprep.mubr.f32.mxu0 0.0
  %113 = vmatmul.mubr.f32.gmra.mrb[0].mxu0 %v37
  %v114 = vpop.f32.mrb[0].mxu0
  %v115 = vadd.f32 %v34, %v114
  %v116 = vpop.f32.mrb[0].mxu0
  %117 = vmatprep.mubr.f32.mxu0 0.0
  %118 = vmatmul.mubr.f32.gmra.mrb[0].mxu0 %v40
  %v119 = vpop.f32.mrb[0].mxu0
  %v120 = vadd.f32 %v34, %v119
  %v121 = vpop.f32.mrb[0].mxu0
  %122 = vmatprep.mubr.f32.mxu0 0.0
  %123 = vmatmul.mubr.f32.gmra.mrb[0].mxu0 %v43
  %v124 = vpop.f32.mrb[0].mxu0
  %v125 = vadd.f32 %v34, %v124
  %v126 = vpop.f32.mrb[0].mxu0
  %127 = vmatprep.mubr.f32.mxu0 0.0
  %128 = vmatmul.mubr.f32.gmra.mrb[0].mxu0 %v46
  %v129 = vpop.f32.mrb[0].mxu0
  %v130 = vadd.f32 %v34, %v129
  %v131 = vpop.f32.mrb[0].mxu0
  %132 = vdwg.mxu0
  %v133 = vlaneseq
  %v134 = vshrl.u32 %v133, 7
  %v135 = vsub.s32 1, %v134
  %v136 = vrot.slane %v17, %v135
  %137 = vmatprep.subr.mxu0 0.0
  %138 = vmatpush1.msra.mxu0 %v27
  %139 = vmatprep.subr.mxu0 0.0
  %140 = vmatpush1.msra.mxu0 %v28
  %141 = vmatprep.subr.mxu0 0.0
  %142 = vmatpush1.msra.mxu0 %v29
  %143 = vmatprep.subr.mxu0 0.0
  %144 = vmatpush1.msra.mxu0 %v30
  %145 = vmatprep.subr.mxu0 0.0
  %146 = vmatpush1.msra.mxu0 0.0
  %147 = vmatprep.subr.mxu0 0.0
  %148 = vmatpush1.msra.mxu0 0.0
  %149 = vmatprep.subr.mxu0 0.0
  %150 = vmatpush1.msra.mxu0 0.0
  %151 = vmatprep.subr.mxu0 0.0
  %152 = vmatpush1.msra.mxu0 0.0
  %153 = vmatprep.subr.mxu0 0.0
  %154 = vmatpush1.msra.mxu0 0.0
  %155 = vmatprep.subr.mxu0 0.0
  %156 = vmatpush1.msra.mxu0 0.0
  %157 = vmatprep.subr.mxu0 0.0
  %158 = vmatpush1.msra.mxu0 0.0
  %159 = vmatprep.subr.mxu0 0.0
  %160 = vmatpush1.msra.mxu0 0.0
  %161 = vmatprep.subr.mxu0 0.0
  %162 = vmatpush1.msra.mxu0 0.0
  %163 = vmatprep.subr.mxu0 0.0
  %164 = vmatpush1.msra.mxu0 0.0
  %165 = vmatprep.subr.mxu0 0.0
  %166 = vmatpush1.msra.mxu0 0.0
  %167 = vmatprep.subr.mxu0 0.0
  %168 = vmatpush1.msra.mxu0 0.0
  %169 = vmatprep.subr.mxu0 0.0
  %170 = vmatpush1.msra.mxu0 0.0
  %171 = vmatprep.subr.mxu0 0.0
  %172 = vmatpush1.msra.mxu0 0.0
  %173 = vmatprep.subr.mxu0 0.0
  %174 = vmatpush1.msra.mxu0 0.0
  %175 = vmatprep.subr.mxu0 0.0
  %176 = vmatpush1.msra.mxu0 0.0
  %177 = vmatprep.subr.mxu0 0.0
  %178 = vmatpush1.msra.mxu0 0.0
  %179 = vmatprep.subr.mxu0 0.0
  %180 = vmatpush1.msra.mxu0 0.0
  %181 = vmatprep.subr.mxu0 0.0
  %182 = vmatpush1.msra.mxu0 0.0
  %183 = vmatprep.subr.mxu0 0.0
  %184 = vmatpush1.msra.mxu0 0.0
  %185 = vmatprep.subr.mxu0 0.0
  %186 = vmatpush1.msra.mxu0 0.0
  %187 = vmatprep.subr.mxu0 0.0
  %188 = vmatpush1.msra.mxu0 0.0
  %189 = vmatprep.subr.mxu0 0.0
  %190 = vmatpush1.msra.mxu0 0.0
  %191 = vmatprep.subr.mxu0 0.0
  %192 = vmatpush1.msra.mxu0 0.0
  %193 = vmatprep.subr.mxu0 0.0
  %194 = vmatpush1.msra.mxu0 0.0
  %195 = vmatprep.subr.mxu0 0.0
  %196 = vmatpush1.msra.mxu0 0.0
  %197 = vmatprep.subr.mxu0 0.0
  %198 = vmatpush1.msra.mxu0 0.0
  %199 = vmatprep.subr.mxu0 0.0
  %200 = vmatpush1.msra.mxu0 0.0
  %201 = vmatprep.mubr.f32.mxu0 0.0
  %202 = vmatmul.mubr.f32.gmra.mrb[0].mxu0 %v37
  %v203 = vpop.f32.mrb[0].mxu0
  %v204 = vadd.f32 %v136, %v203
  %v205 = vpop.f32.mrb[0].mxu0
  %206 = vmatprep.mubr.f32.mxu0 0.0
  %207 = vmatmul.mubr.f32.gmra.mrb[0].mxu0 %v40
  %v208 = vpop.f32.mrb[0].mxu0
  %v209 = vadd.f32 %v136, %v208
  %v210 = vpop.f32.mrb[0].mxu0
  %211 = vmatprep.mubr.f32.mxu0 0.0
  %212 = vmatmul.mubr.f32.gmra.mrb[0].mxu0 %v43
  %v213 = vpop.f32.mrb[0].mxu0
  %v214 = vadd.f32 %v136, %v213
  %v215 = vpop.f32.mrb[0].mxu0
  %216 = vmatprep.mubr.f32.mxu0 0.0
  %217 = vmatmul.mubr.f32.gmra.mrb[0].mxu0 %v46
  %v218 = vpop.f32.mrb[0].mxu0
  %v219 = vadd.f32 %v136, %v218
  %v220 = vpop.f32.mrb[0].mxu0
  %221 = vdwg.mxu0
  %v222 = vmul.f32 %v204, 0.5
  %v223 = vmul.f32 %v209, 0.5
  %v224 = vmul.f32 %v214, 0.5
  %v225 = vmul.f32 %v219, 0.5
  %v226 = vtanh.pop %v222
  %v227 = vtanh.pop %v223
  %v228 = vtanh.pop %v224
  %v229 = vtanh.pop %v225
  %v230 = vmul.f32 %v226, 0.5
  %v231 = vmul.f32 %v227, 0.5
  %v232 = vmul.f32 %v228, 0.5
  %v233 = vmul.f32 %v229, 0.5
  %v234 = vadd.f32 %v230, 0.5
  %v235 = vadd.f32 %v231, 0.5
  %v236 = vadd.f32 %v232, 0.5
  %v237 = vadd.f32 %v233, 0.5
  %v238 = vmul.f32 %v115, %v234
  %v239 = vmul.f32 %v120, %v235
  %v240 = vmul.f32 %v125, %v236
  %v241 = vmul.f32 %v130, %v237
  %v242 = vld [vmem:[%s2] sm:$0xff]
  %v243 = vld [vmem:[%s2 + $0x8] sm:$0xff]
  %v244 = vld [vmem:[%s2 + $0x10] sm:$0xff]
  %v245 = vld [vmem:[%s2 + $0x18] sm:$0xff]
  %v247 = vsel %vm35, %v242, 0
  %v250 = vsel %vm35, %v243, 0
  %v253 = vsel %vm35, %v244, 0
  %v256 = vsel %vm35, %v245, 0
  %258 = vmatprep.subr.mxu0 0.0
  %259 = vmatpush1.msra.mxu0 %v238
  %260 = vmatprep.subr.mxu0 0.0
  %261 = vmatpush1.msra.mxu0 %v239
  %262 = vmatprep.subr.mxu0 0.0
  %263 = vmatpush1.msra.mxu0 %v240
  %264 = vmatprep.subr.mxu0 0.0
  %265 = vmatpush1.msra.mxu0 %v241
  %266 = vmatprep.subr.mxu0 0.0
  %267 = vmatpush1.msra.mxu0 0.0
  %268 = vmatprep.subr.mxu0 0.0
  %269 = vmatpush1.msra.mxu0 0.0
  %270 = vmatprep.subr.mxu0 0.0
  %271 = vmatpush1.msra.mxu0 0.0
  %272 = vmatprep.subr.mxu0 0.0
  %273 = vmatpush1.msra.mxu0 0.0
  %274 = vmatprep.subr.mxu0 0.0
  %275 = vmatpush1.msra.mxu0 0.0
  %276 = vmatprep.subr.mxu0 0.0
  %277 = vmatpush1.msra.mxu0 0.0
  %278 = vmatprep.subr.mxu0 0.0
  %279 = vmatpush1.msra.mxu0 0.0
  %280 = vmatprep.subr.mxu0 0.0
  %281 = vmatpush1.msra.mxu0 0.0
  %282 = vmatprep.subr.mxu0 0.0
  %283 = vmatpush1.msra.mxu0 0.0
  %284 = vmatprep.subr.mxu0 0.0
  %285 = vmatpush1.msra.mxu0 0.0
  %286 = vmatprep.subr.mxu0 0.0
  %287 = vmatpush1.msra.mxu0 0.0
  %288 = vmatprep.subr.mxu0 0.0
  %289 = vmatpush1.msra.mxu0 0.0
  %290 = vmatprep.subr.mxu0 0.0
  %291 = vmatpush1.msra.mxu0 0.0
  %292 = vmatprep.subr.mxu0 0.0
  %293 = vmatpush1.msra.mxu0 0.0
  %294 = vmatprep.subr.mxu0 0.0
  %295 = vmatpush1.msra.mxu0 0.0
  %296 = vmatprep.subr.mxu0 0.0
  %297 = vmatpush1.msra.mxu0 0.0
  %298 = vmatprep.subr.mxu0 0.0
  %299 = vmatpush1.msra.mxu0 0.0
  %300 = vmatprep.subr.mxu0 0.0
  %301 = vmatpush1.msra.mxu0 0.0
  %302 = vmatprep.subr.mxu0 0.0
  %303 = vmatpush1.msra.mxu0 0.0
  %304 = vmatprep.subr.mxu0 0.0
  %305 = vmatpush1.msra.mxu0 0.0
  %306 = vmatprep.subr.mxu0 0.0
  %307 = vmatpush1.msra.mxu0 0.0
  %308 = vmatprep.subr.mxu0 0.0
  %309 = vmatpush1.msra.mxu0 0.0
  %310 = vmatprep.subr.mxu0 0.0
  %311 = vmatpush1.msra.mxu0 0.0
  %312 = vmatprep.subr.mxu0 0.0
  %313 = vmatpush1.msra.mxu0 0.0
  %314 = vmatprep.subr.mxu0 0.0
  %315 = vmatpush1.msra.mxu0 0.0
  %316 = vmatprep.subr.mxu0 0.0
  %317 = vmatpush1.msra.mxu0 0.0
  %318 = vmatprep.subr.mxu0 0.0
  %319 = vmatpush1.msra.mxu0 0.0
  %320 = vmatprep.subr.mxu0 0.0
  %321 = vmatpush1.msra.mxu0 0.0
  %322 = vmatprep.mubr.f32.mxu0 0.0
  %323 = vmatmul.mubr.f32.gmra.mrb[0].mxu0 %v247
  %v324 = vpop.f32.mrb[0].mxu0
  %v325 = vadd.f32 0.0, %v324
  %v326 = vpop.f32.mrb[0].mxu0
  %327 = vmatprep.mubr.f32.mxu0 0.0
  %328 = vmatmul.mubr.f32.gmra.mrb[0].mxu0 %v250
  %v329 = vpop.f32.mrb[0].mxu0
  %v330 = vadd.f32 0.0, %v329
  %v331 = vpop.f32.mrb[0].mxu0
  %332 = vmatprep.mubr.f32.mxu0 0.0
  %333 = vmatmul.mubr.f32.gmra.mrb[0].mxu0 %v253
  %v334 = vpop.f32.mrb[0].mxu0
  %v335 = vadd.f32 0.0, %v334
  %v336 = vpop.f32.mrb[0].mxu0
  %337 = vmatprep.mubr.f32.mxu0 0.0
  %338 = vmatmul.mubr.f32.gmra.mrb[0].mxu0 %v256
  %v339 = vpop.f32.mrb[0].mxu0
  %v340 = vadd.f32 0.0, %v339
  %v341 = vpop.f32.mrb[0].mxu0
  %342 = vdwg.mxu0
  %v343 = vld [vmem:[%s1 + $0x40] sm:$0xff]
  %v344 = vld [vmem:[%s1 + $0x48] sm:$0xff]
  %v345 = vld [vmem:[%s1 + $0x50] sm:$0xff]
  %v346 = vld [vmem:[%s1 + $0x58] sm:$0xff]
  %v347 = vld [vmem:[%s1 + $0x60] sm:$0xff]
  %v348 = vld [vmem:[%s1 + $0x68] sm:$0xff]
  %v349 = vld [vmem:[%s1 + $0x70] sm:$0xff]
  %v350 = vld [vmem:[%s1 + $0x78] sm:$0xff]
  %v351 = vld [vmem:[%s2 + $0x20] sm:$0xff]
  %v352 = vld [vmem:[%s2 + $0x28] sm:$0xff]
  %v353 = vld [vmem:[%s2 + $0x30] sm:$0xff]
  %v354 = vld [vmem:[%s2 + $0x38] sm:$0xff]
  %v356 = vsel %vm35, %v351, 0
  %v359 = vsel %vm35, %v352, 0
  %v362 = vsel %vm35, %v353, 0
  %v365 = vsel %vm35, %v354, 0
  %367 = vmatprep.subr.mxu0 0.0
  %368 = vmatpush1.msra.mxu0 %v238
  %369 = vmatprep.subr.mxu0 0.0
  %370 = vmatpush1.msra.mxu0 %v239
  %371 = vmatprep.subr.mxu0 0.0
  %372 = vmatpush1.msra.mxu0 %v240
  %373 = vmatprep.subr.mxu0 0.0
  %374 = vmatpush1.msra.mxu0 %v241
  %375 = vmatprep.subr.mxu0 0.0
  %376 = vmatpush1.msra.mxu0 0.0
  %377 = vmatprep.subr.mxu0 0.0
  %378 = vmatpush1.msra.mxu0 0.0
  %379 = vmatprep.subr.mxu0 0.0
  %380 = vmatpush1.msra.mxu0 0.0
  %381 = vmatprep.subr.mxu0 0.0
  %382 = vmatpush1.msra.mxu0 0.0
  %383 = vmatprep.subr.mxu0 0.0
  %384 = vmatpush1.msra.mxu0 0.0
  %385 = vmatprep.subr.mxu0 0.0
  %386 = vmatpush1.msra.mxu0 0.0
  %387 = vmatprep.subr.mxu0 0.0
  %388 = vmatpush1.msra.mxu0 0.0
  %389 = vmatprep.subr.mxu0 0.0
  %390 = vmatpush1.msra.mxu0 0.0
  %391 = vmatprep.subr.mxu0 0.0
  %392 = vmatpush1.msra.mxu0 0.0
  %393 = vmatprep.subr.mxu0 0.0
  %394 = vmatpush1.msra.mxu0 0.0
  %395 = vmatprep.subr.mxu0 0.0
  %396 = vmatpush1.msra.mxu0 0.0
  %397 = vmatprep.subr.mxu0 0.0
  %398 = vmatpush1.msra.mxu0 0.0
  %399 = vmatprep.subr.mxu0 0.0
  %400 = vmatpush1.msra.mxu0 0.0
  %401 = vmatprep.subr.mxu0 0.0
  %402 = vmatpush1.msra.mxu0 0.0
  %403 = vmatprep.subr.mxu0 0.0
  %404 = vmatpush1.msra.mxu0 0.0
  %405 = vmatprep.subr.mxu0 0.0
  %406 = vmatpush1.msra.mxu0 0.0
  %407 = vmatprep.subr.mxu0 0.0
  %408 = vmatpush1.msra.mxu0 0.0
  %409 = vmatprep.subr.mxu0 0.0
  %410 = vmatpush1.msra.mxu0 0.0
  %411 = vmatprep.subr.mxu0 0.0
  %412 = vmatpush1.msra.mxu0 0.0
  %413 = vmatprep.subr.mxu0 0.0
  %414 = vmatpush1.msra.mxu0 0.0
  %415 = vmatprep.subr.mxu0 0.0
  %416 = vmatpush1.msra.mxu0 0.0
  %417 = vmatprep.subr.mxu0 0.0
  %418 = vmatpush1.msra.mxu0 0.0
  %419 = vmatprep.subr.mxu0 0.0
  %420 = vmatpush1.msra.mxu0 0.0
  %421 = vmatprep.subr.mxu0 0.0
  %422 = vmatpush1.msra.mxu0 0.0
  %423 = vmatprep.subr.mxu0 0.0
  %424 = vmatpush1.msra.mxu0 0.0
  %425 = vmatprep.subr.mxu0 0.0
  %426 = vmatpush1.msra.mxu0 0.0
  %427 = vmatprep.subr.mxu0 0.0
  %428 = vmatpush1.msra.mxu0 0.0
  %429 = vmatprep.subr.mxu0 0.0
  %430 = vmatpush1.msra.mxu0 0.0
  %431 = vmatprep.mubr.f32.mxu0 0.0
  %432 = vmatmul.mubr.f32.gmra.mrb[0].mxu0 %v356
  %v433 = vpop.f32.mrb[0].mxu0
  %v434 = vadd.f32 0.0, %v433
  %v435 = vpop.f32.mrb[0].mxu0
  %436 = vmatprep.mubr.f32.mxu0 0.0
  %437 = vmatmul.mubr.f32.gmra.mrb[0].mxu0 %v359
  %v438 = vpop.f32.mrb[0].mxu0
  %v439 = vadd.f32 0.0, %v438
  %v440 = vpop.f32.mrb[0].mxu0
  %441 = vmatprep.mubr.f32.mxu0 0.0
  %442 = vmatmul.mubr.f32.gmra.mrb[0].mxu0 %v362
  %v443 = vpop.f32.mrb[0].mxu0
  %v444 = vadd.f32 0.0, %v443
  %v445 = vpop.f32.mrb[0].mxu0
  %446 = vmatprep.mubr.f32.mxu0 0.0
  %447 = vmatmul.mubr.f32.gmra.mrb[0].mxu0 %v365
  %v448 = vpop.f32.mrb[0].mxu0
  %v449 = vadd.f32 0.0, %v448
  %v450 = vpop.f32.mrb[0].mxu0
  %451 = vdwg.mxu0
  %v452 = vld [vmem:[%s1 + $0x80] sm:$0xff]
  %v453 = vld [vmem:[%s1 + $0x88] sm:$0xff]
  %v454 = vld [vmem:[%s1 + $0x90] sm:$0xff]
  %v455 = vld [vmem:[%s1 + $0x98] sm:$0xff]
  %v456 = vld [vmem:[%s1 + $0xa0] sm:$0xff]
  %v457 = vld [vmem:[%s1 + $0xa8] sm:$0xff]
  %v458 = vld [vmem:[%s1 + $0xb0] sm:$0xff]
  %v459 = vld [vmem:[%s1 + $0xb8] sm:$0xff]
  %vm460 = vcmask 523264
  %v462 = vsel %vm460, %v434, 0
  %v465 = vsel %vm460, %v439, 0
  %v468 = vsel %vm460, %v444, 0
  %v471 = vsel %vm460, %v449, 0
  %473 = vmatprep.subr.mxu0 0.0
  %474 = vmatpush1.msra.mxu0 %v452
  %475 = vmatprep.subr.mxu0 0.0
  %476 = vmatpush1.msra.mxu0 %v453
  %477 = vmatprep.subr.mxu0 0.0
  %478 = vmatpush1.msra.mxu0 %v454
  %479 = vmatprep.subr.mxu0 0.0
  %480 = vmatpush1.msra.mxu0 %v455
  %481 = vmatprep.subr.mxu0 0.0
  %482 = vmatpush1.msra.mxu0 %v456
  %483 = vmatprep.subr.mxu0 0.0
  %484 = vmatpush1.msra.mxu0 %v457
  %485 = vmatprep.subr.mxu0 0.0
  %486 = vmatpush1.msra.mxu0 %v458
  %487 = vmatprep.subr.mxu0 0.0
  %488 = vmatpush1.msra.mxu0 %v459
  %489 = vmatprep.subr.mxu0 0.0
  %490 = vmatpush1.msra.mxu0 0.0
  %491 = vmatprep.subr.mxu0 0.0
  %492 = vmatpush1.msra.mxu0 0.0
  %493 = vmatprep.subr.mxu0 0.0
  %494 = vmatpush1.msra.mxu0 0.0
  %495 = vmatprep.subr.mxu0 0.0
  %496 = vmatpush1.msra.mxu0 0.0
  %497 = vmatprep.subr.mxu0 0.0
  %498 = vmatpush1.msra.mxu0 0.0
  %499 = vmatprep.subr.mxu0 0.0
  %500 = vmatpush1.msra.mxu0 0.0
  %501 = vmatprep.subr.mxu0 0.0
  %502 = vmatpush1.msra.mxu0 0.0
  %503 = vmatprep.subr.mxu0 0.0
  %504 = vmatpush1.msra.mxu0 0.0
  %505 = vmatprep.subr.mxu0 0.0
  %506 = vmatpush1.msra.mxu0 0.0
  %507 = vmatprep.subr.mxu0 0.0
  %508 = vmatpush1.msra.mxu0 0.0
  %509 = vmatprep.subr.mxu0 0.0
  %510 = vmatpush1.msra.mxu0 0.0
  %511 = vmatprep.subr.mxu0 0.0
  %512 = vmatpush1.msra.mxu0 0.0
  %513 = vmatprep.subr.mxu0 0.0
  %514 = vmatpush1.msra.mxu0 0.0
  %515 = vmatprep.subr.mxu0 0.0
  %516 = vmatpush1.msra.mxu0 0.0
  %517 = vmatprep.subr.mxu0 0.0
  %518 = vmatpush1.msra.mxu0 0.0
  %519 = vmatprep.subr.mxu0 0.0
  %520 = vmatpush1.msra.mxu0 0.0
  %521 = vmatprep.subr.mxu0 0.0
  %522 = vmatpush1.msra.mxu0 0.0
  %523 = vmatprep.subr.mxu0 0.0
  %524 = vmatpush1.msra.mxu0 0.0
  %525 = vmatprep.subr.mxu0 0.0
  %526 = vmatpush1.msra.mxu0 0.0
  %527 = vmatprep.subr.mxu0 0.0
  %528 = vmatpush1.msra.mxu0 0.0
  %529 = vmatprep.subr.mxu0 0.0
  %530 = vmatpush1.msra.mxu0 0.0
  %531 = vmatprep.subr.mxu0 0.0
  %532 = vmatpush1.msra.mxu0 0.0
  %533 = vmatprep.subr.mxu0 0.0
  %534 = vmatpush1.msra.mxu0 0.0
  %535 = vmatprep.subr.mxu0 0.0
  %536 = vmatpush1.msra.mxu0 0.0
  %537 = vmatprep.mubr.f32.mxu0 0.0
  %538 = vmatmul.mubr.f32.gmra.mrb[0].mxu0 %v462
  %v539 = vpop.f32.mrb[0].mxu0
  %v540 = vadd.f32 0.0, %v539
  %v541 = vpop.f32.mrb[0].mxu0
  %542 = vmatprep.mubr.f32.mxu0 0.0
  %543 = vmatmul.mubr.f32.gmra.mrb[0].mxu0 %v465
  %v544 = vpop.f32.mrb[0].mxu0
  %v545 = vadd.f32 0.0, %v544
  %v546 = vpop.f32.mrb[0].mxu0
  %547 = vmatprep.mubr.f32.mxu0 0.0
  %548 = vmatmul.mubr.f32.gmra.mrb[0].mxu0 %v468
  %v549 = vpop.f32.mrb[0].mxu0
  %v550 = vadd.f32 0.0, %v549
  %v551 = vpop.f32.mrb[0].mxu0
  %552 = vmatprep.mubr.f32.mxu0 0.0
  %553 = vmatmul.mubr.f32.gmra.mrb[0].mxu0 %v471
  %v554 = vpop.f32.mrb[0].mxu0
  %v555 = vadd.f32 0.0, %v554
  %v556 = vpop.f32.mrb[0].mxu0
  %557 = vdwg.mxu0
  %v559 = vsel %vm460, %v325, 0
  %v562 = vsel %vm460, %v330, 0
  %v565 = vsel %vm460, %v335, 0
  %v568 = vsel %vm460, %v340, 0
  %570 = vmatprep.subr.mxu0 0.0
  %571 = vmatpush1.msra.mxu0 %v343
  %572 = vmatprep.subr.mxu0 0.0
  %573 = vmatpush1.msra.mxu0 %v344
  %574 = vmatprep.subr.mxu0 0.0
  %575 = vmatpush1.msra.mxu0 %v345
  %576 = vmatprep.subr.mxu0 0.0
  %577 = vmatpush1.msra.mxu0 %v346
  %578 = vmatprep.subr.mxu0 0.0
  %579 = vmatpush1.msra.mxu0 %v347
  %580 = vmatprep.subr.mxu0 0.0
  %581 = vmatpush1.msra.mxu0 %v348
  %582 = vmatprep.subr.mxu0 0.0
  %583 = vmatpush1.msra.mxu0 %v349
  %584 = vmatprep.subr.mxu0 0.0
  %585 = vmatpush1.msra.mxu0 %v350
  %586 = vmatprep.subr.mxu0 0.0
  %587 = vmatpush1.msra.mxu0 0.0
  %588 = vmatprep.subr.mxu0 0.0
  %589 = vmatpush1.msra.mxu0 0.0
  %590 = vmatprep.subr.mxu0 0.0
  %591 = vmatpush1.msra.mxu0 0.0
  %592 = vmatprep.subr.mxu0 0.0
  %593 = vmatpush1.msra.mxu0 0.0
  %594 = vmatprep.subr.mxu0 0.0
  %595 = vmatpush1.msra.mxu0 0.0
  %596 = vmatprep.subr.mxu0 0.0
  %597 = vmatpush1.msra.mxu0 0.0
  %598 = vmatprep.subr.mxu0 0.0
  %599 = vmatpush1.msra.mxu0 0.0
  %600 = vmatprep.subr.mxu0 0.0
  %601 = vmatpush1.msra.mxu0 0.0
  %602 = vmatprep.subr.mxu0 0.0
  %603 = vmatpush1.msra.mxu0 0.0
  %604 = vmatprep.subr.mxu0 0.0
  %605 = vmatpush1.msra.mxu0 0.0
  %606 = vmatprep.subr.mxu0 0.0
  %607 = vmatpush1.msra.mxu0 0.0
  %608 = vmatprep.subr.mxu0 0.0
  %609 = vmatpush1.msra.mxu0 0.0
  %610 = vmatprep.subr.mxu0 0.0
  %611 = vmatpush1.msra.mxu0 0.0
  %612 = vmatprep.subr.mxu0 0.0
  %613 = vmatpush1.msra.mxu0 0.0
  %614 = vmatprep.subr.mxu0 0.0
  %615 = vmatpush1.msra.mxu0 0.0
  %616 = vmatprep.subr.mxu0 0.0
  %617 = vmatpush1.msra.mxu0 0.0
  %618 = vmatprep.subr.mxu0 0.0
  %619 = vmatpush1.msra.mxu0 0.0
  %620 = vmatprep.subr.mxu0 0.0
  %621 = vmatpush1.msra.mxu0 0.0
  %622 = vmatprep.subr.mxu0 0.0
  %623 = vmatpush1.msra.mxu0 0.0
  %624 = vmatprep.subr.mxu0 0.0
  %625 = vmatpush1.msra.mxu0 0.0
  %626 = vmatprep.subr.mxu0 0.0
  %627 = vmatpush1.msra.mxu0 0.0
  %628 = vmatprep.subr.mxu0 0.0
  %629 = vmatpush1.msra.mxu0 0.0
  %630 = vmatprep.subr.mxu0 0.0
  %631 = vmatpush1.msra.mxu0 0.0
  %632 = vmatprep.subr.mxu0 0.0
  %633 = vmatpush1.msra.mxu0 0.0
  %634 = vmatprep.mubr.f32.mxu0 0.0
  %635 = vmatmul.mubr.f32.gmra.mrb[0].mxu0 %v559
  %v636 = vpop.f32.mrb[0].mxu0
  %v637 = vadd.f32 %v540, %v636
  %v638 = vpop.f32.mrb[0].mxu0
  %639 = vmatprep.mubr.f32.mxu0 0.0
  %640 = vmatmul.mubr.f32.gmra.mrb[0].mxu0 %v562
  %v641 = vpop.f32.mrb[0].mxu0
  %v642 = vadd.f32 %v545, %v641
  %v643 = vpop.f32.mrb[0].mxu0
  %644 = vmatprep.mubr.f32.mxu0 0.0
  %645 = vmatmul.mubr.f32.gmra.mrb[0].mxu0 %v565
  %v646 = vpop.f32.mrb[0].mxu0
  %v647 = vadd.f32 %v550, %v646
  %v648 = vpop.f32.mrb[0].mxu0
  %649 = vmatprep.mubr.f32.mxu0 0.0
  %650 = vmatmul.mubr.f32.gmra.mrb[0].mxu0 %v568
  %v651 = vpop.f32.mrb[0].mxu0
  %v652 = vadd.f32 %v555, %v651
  %v653 = vpop.f32.mrb[0].mxu0
  %654 = vdwg.mxu0
  %v655 = vlaneseq
  %v656 = vshrl.u32 %v655, 7
  %v657 = vsub.s32 2, %v656
  %v658 = vrot.slane %v17, %v657
  %v659 = vadd.f32 %v637, %v658
  %v660 = vadd.f32 %v642, %v658
  %v661 = vadd.f32 %v647, %v658
  %v662 = vadd.f32 %v652, %v658
  %v663 = vmax.f32 %v659, 0.0
  %v664 = vmax.f32 %v660, 0.0
  %v665 = vmax.f32 %v661, 0.0
  %v666 = vmax.f32 %v662, 0.0
  %v667 = vld [vmem:[%s1 + $0xc0] sm:$0xff]
  %v668 = vld [vmem:[%s1 + $0xc8] sm:$0xff]
  %v669 = vld [vmem:[%s1 + $0xd0] sm:$0xff]
  %v670 = vld [vmem:[%s1 + $0xd8] sm:$0xff]
  %v671 = vld [vmem:[%s1 + $0xe0] sm:$0xff]
  %v672 = vld [vmem:[%s1 + $0xe8] sm:$0xff]
  %v673 = vld [vmem:[%s1 + $0xf0] sm:$0xff]
  %v674 = vld [vmem:[%s1 + $0xf8] sm:$0xff]
  %v675 = vld [vmem:[%s1 + $0x100] sm:$0xff]
  %v676 = vld [vmem:[%s1 + $0x108] sm:$0xff]
  %v677 = vld [vmem:[%s1 + $0x110] sm:$0xff]
  %v678 = vld [vmem:[%s1 + $0x118] sm:$0xff]
  %v679 = vld [vmem:[%s1 + $0x120] sm:$0xff]
  %v680 = vld [vmem:[%s1 + $0x128] sm:$0xff]
  %v681 = vld [vmem:[%s1 + $0x130] sm:$0xff]
  %v682 = vld [vmem:[%s1 + $0x138] sm:$0xff]
  %v683 = vlaneseq
  %v684 = vshrl.u32 %v683, 7
  %v685 = vsub.s32 3, %v684
  %v686 = vrot.slane %v17, %v685
  %v688 = vsel %vm460, %v663, 0
  %v691 = vsel %vm460, %v664, 0
  %v694 = vsel %vm460, %v665, 0
  %v697 = vsel %vm460, %v666, 0
  %699 = vmatprep.subr.mxu0 0.0
  %700 = vmatpush1.msra.mxu0 %v667
  %701 = vmatprep.subr.mxu0 0.0
  %702 = vmatpush1.msra.mxu0 %v668
  %703 = vmatprep.subr.mxu0 0.0
  %704 = vmatpush1.msra.mxu0 %v669
  %705 = vmatprep.subr.mxu0 0.0
  %706 = vmatpush1.msra.mxu0 %v670
  %707 = vmatprep.subr.mxu0 0.0
  %708 = vmatpush1.msra.mxu0 %v671
  %709 = vmatprep.subr.mxu0 0.0
  %710 = vmatpush1.msra.mxu0 %v672
  %711 = vmatprep.subr.mxu0 0.0
  %712 = vmatpush1.msra.mxu0 %v673
  %713 = vmatprep.subr.mxu0 0.0
  %714 = vmatpush1.msra.mxu0 %v674
  %715 = vmatprep.subr.mxu0 0.0
  %716 = vmatpush1.msra.mxu0 0.0
  %717 = vmatprep.subr.mxu0 0.0
  %718 = vmatpush1.msra.mxu0 0.0
  %719 = vmatprep.subr.mxu0 0.0
  %720 = vmatpush1.msra.mxu0 0.0
  %721 = vmatprep.subr.mxu0 0.0
  %722 = vmatpush1.msra.mxu0 0.0
  %723 = vmatprep.subr.mxu0 0.0
  %724 = vmatpush1.msra.mxu0 0.0
  %725 = vmatprep.subr.mxu0 0.0
  %726 = vmatpush1.msra.mxu0 0.0
  %727 = vmatprep.subr.mxu0 0.0
  %728 = vmatpush1.msra.mxu0 0.0
  %729 = vmatprep.subr.mxu0 0.0
  %730 = vmatpush1.msra.mxu0 0.0
  %731 = vmatprep.subr.mxu0 0.0
  %732 = vmatpush1.msra.mxu0 0.0
  %733 = vmatprep.subr.mxu0 0.0
  %734 = vmatpush1.msra.mxu0 0.0
  %735 = vmatprep.subr.mxu0 0.0
  %736 = vmatpush1.msra.mxu0 0.0
  %737 = vmatprep.subr.mxu0 0.0
  %738 = vmatpush1.msra.mxu0 0.0
  %739 = vmatprep.subr.mxu0 0.0
  %740 = vmatpush1.msra.mxu0 0.0
  %741 = vmatprep.subr.mxu0 0.0
  %742 = vmatpush1.msra.mxu0 0.0
  %743 = vmatprep.subr.mxu0 0.0
  %744 = vmatpush1.msra.mxu0 0.0
  %745 = vmatprep.subr.mxu0 0.0
  %746 = vmatpush1.msra.mxu0 0.0
  %747 = vmatprep.subr.mxu0 0.0
  %748 = vmatpush1.msra.mxu0 0.0
  %749 = vmatprep.subr.mxu0 0.0
  %750 = vmatpush1.msra.mxu0 0.0
  %751 = vmatprep.subr.mxu0 0.0
  %752 = vmatpush1.msra.mxu0 0.0
  %753 = vmatprep.subr.mxu0 0.0
  %754 = vmatpush1.msra.mxu0 0.0
  %755 = vmatprep.subr.mxu0 0.0
  %756 = vmatpush1.msra.mxu0 0.0
  %757 = vmatprep.subr.mxu0 0.0
  %758 = vmatpush1.msra.mxu0 0.0
  %759 = vmatprep.subr.mxu0 0.0
  %760 = vmatpush1.msra.mxu0 0.0
  %761 = vmatprep.subr.mxu0 0.0
  %762 = vmatpush1.msra.mxu0 0.0
  %763 = vmatprep.mubr.f32.mxu0 0.0
  %764 = vmatmul.mubr.f32.gmra.mrb[0].mxu0 %v688
  %v765 = vpop.f32.mrb[0].mxu0
  %v766 = vadd.f32 %v686, %v765
  %v767 = vpop.f32.mrb[0].mxu0
  %768 = vmatprep.mubr.f32.mxu0 0.0
  %769 = vmatmul.mubr.f32.gmra.mrb[0].mxu0 %v691
  %v770 = vpop.f32.mrb[0].mxu0
  %v771 = vadd.f32 %v686, %v770
  %v772 = vpop.f32.mrb[0].mxu0
  %773 = vmatprep.mubr.f32.mxu0 0.0
  %774 = vmatmul.mubr.f32.gmra.mrb[0].mxu0 %v694
  %v775 = vpop.f32.mrb[0].mxu0
  %v776 = vadd.f32 %v686, %v775
  %v777 = vpop.f32.mrb[0].mxu0
  %778 = vmatprep.mubr.f32.mxu0 0.0
  %779 = vmatmul.mubr.f32.gmra.mrb[0].mxu0 %v697
  %v780 = vpop.f32.mrb[0].mxu0
  %v781 = vadd.f32 %v686, %v780
  %v782 = vpop.f32.mrb[0].mxu0
  %783 = vdwg.mxu0
  %v784 = vlaneseq
  %v785 = vshrl.u32 %v784, 7
  %v786 = vsub.s32 4, %v785
  %v787 = vrot.slane %v17, %v786
  %788 = vmatprep.subr.mxu0 0.0
  %789 = vmatpush1.msra.mxu0 %v675
  %790 = vmatprep.subr.mxu0 0.0
  %791 = vmatpush1.msra.mxu0 %v676
  %792 = vmatprep.subr.mxu0 0.0
  %793 = vmatpush1.msra.mxu0 %v677
  %794 = vmatprep.subr.mxu0 0.0
  %795 = vmatpush1.msra.mxu0 %v678
  %796 = vmatprep.subr.mxu0 0.0
  %797 = vmatpush1.msra.mxu0 %v679
  %798 = vmatprep.subr.mxu0 0.0
  %799 = vmatpush1.msra.mxu0 %v680
  %800 = vmatprep.subr.mxu0 0.0
  %801 = vmatpush1.msra.mxu0 %v681
  %802 = vmatprep.subr.mxu0 0.0
  %803 = vmatpush1.msra.mxu0 %v682
  %804 = vmatprep.subr.mxu0 0.0
  %805 = vmatpush1.msra.mxu0 0.0
  %806 = vmatprep.subr.mxu0 0.0
  %807 = vmatpush1.msra.mxu0 0.0
  %808 = vmatprep.subr.mxu0 0.0
  %809 = vmatpush1.msra.mxu0 0.0
  %810 = vmatprep.subr.mxu0 0.0
  %811 = vmatpush1.msra.mxu0 0.0
  %812 = vmatprep.subr.mxu0 0.0
  %813 = vmatpush1.msra.mxu0 0.0
  %814 = vmatprep.subr.mxu0 0.0
  %815 = vmatpush1.msra.mxu0 0.0
  %816 = vmatprep.subr.mxu0 0.0
  %817 = vmatpush1.msra.mxu0 0.0
  %818 = vmatprep.subr.mxu0 0.0
  %819 = vmatpush1.msra.mxu0 0.0
  %820 = vmatprep.subr.mxu0 0.0
  %821 = vmatpush1.msra.mxu0 0.0
  %822 = vmatprep.subr.mxu0 0.0
  %823 = vmatpush1.msra.mxu0 0.0
  %824 = vmatprep.subr.mxu0 0.0
  %825 = vmatpush1.msra.mxu0 0.0
  %826 = vmatprep.subr.mxu0 0.0
  %827 = vmatpush1.msra.mxu0 0.0
  %828 = vmatprep.subr.mxu0 0.0
  %829 = vmatpush1.msra.mxu0 0.0
  %830 = vmatprep.subr.mxu0 0.0
  %831 = vmatpush1.msra.mxu0 0.0
  %832 = vmatprep.subr.mxu0 0.0
  %833 = vmatpush1.msra.mxu0 0.0
  %834 = vmatprep.subr.mxu0 0.0
  %835 = vmatpush1.msra.mxu0 0.0
  %836 = vmatprep.subr.mxu0 0.0
  %837 = vmatpush1.msra.mxu0 0.0
  %838 = vmatprep.subr.mxu0 0.0
  %839 = vmatpush1.msra.mxu0 0.0
  %840 = vmatprep.subr.mxu0 0.0
  %841 = vmatpush1.msra.mxu0 0.0
  %842 = vmatprep.subr.mxu0 0.0
  %843 = vmatpush1.msra.mxu0 0.0
  %844 = vmatprep.subr.mxu0 0.0
  %845 = vmatpush1.msra.mxu0 0.0
  %846 = vmatprep.subr.mxu0 0.0
  %847 = vmatpush1.msra.mxu0 0.0
  %848 = vmatprep.subr.mxu0 0.0
  %849 = vmatpush1.msra.mxu0 0.0
  %850 = vmatprep.subr.mxu0 0.0
  %851 = vmatpush1.msra.mxu0 0.0
  %852 = vmatprep.mubr.f32.mxu0 0.0
  %853 = vmatmul.mubr.f32.gmra.mrb[0].mxu0 %v688
  %v854 = vpop.f32.mrb[0].mxu0
  %v855 = vadd.f32 %v787, %v854
  %v856 = vpop.f32.mrb[0].mxu0
  %857 = vmatprep.mubr.f32.mxu0 0.0
  %858 = vmatmul.mubr.f32.gmra.mrb[0].mxu0 %v691
  %v859 = vpop.f32.mrb[0].mxu0
  %v860 = vadd.f32 %v787, %v859
  %v861 = vpop.f32.mrb[0].mxu0
  %862 = vmatprep.mubr.f32.mxu0 0.0
  %863 = vmatmul.mubr.f32.gmra.mrb[0].mxu0 %v694
  %v864 = vpop.f32.mrb[0].mxu0
  %v865 = vadd.f32 %v787, %v864
  %v866 = vpop.f32.mrb[0].mxu0
  %867 = vmatprep.mubr.f32.mxu0 0.0
  %868 = vmatmul.mubr.f32.gmra.mrb[0].mxu0 %v697
  %v869 = vpop.f32.mrb[0].mxu0
  %v870 = vadd.f32 %v787, %v869
  %v871 = vpop.f32.mrb[0].mxu0
  %872 = vdwg.mxu0
  %v873 = vmul.f32 %v855, 0.5
  %v874 = vmul.f32 %v860, 0.5
  %v875 = vmul.f32 %v865, 0.5
  %v876 = vmul.f32 %v870, 0.5
  %v877 = vtanh.pop %v873
  %v878 = vtanh.pop %v874
  %v879 = vtanh.pop %v875
  %v880 = vtanh.pop %v876
  %v881 = vmul.f32 %v877, 0.5
  %v882 = vmul.f32 %v878, 0.5
  %v883 = vmul.f32 %v879, 0.5
  %v884 = vmul.f32 %v880, 0.5
  %v885 = vadd.f32 %v881, 0.5
  %v886 = vadd.f32 %v882, 0.5
  %v887 = vadd.f32 %v883, 0.5
  %v888 = vadd.f32 %v884, 0.5
  %v889 = vmul.f32 %v766, %v885
  %v890 = vmul.f32 %v771, %v886
  %v891 = vmul.f32 %v776, %v887
  %v892 = vmul.f32 %v781, %v888
  %v893 = vlaneseq
  %v894 = vshrl.u32 %v893, 7
  %v895 = vsub.s32 5, %v894
  %v896 = vrot.slane %v17, %v895
  %v897 = vmul.f32 %v889, %v896
  %v898 = vmul.f32 %v890, %v896
  %v899 = vsel %vm460, %v897, 0.0
  %900 = vadd.xlane.f32.xlu0 %v899
  %v901 = vpop.xlane.xlu0 %900
  %v902 = vsel %vm460, %v898, 0.0
  %903 = vadd.xlane.f32.xlu0 %v902
  %v904 = vpop.xlane.xlu0 %903
  %v905 = vadd.f32 %v901, %v904
  %v906 = vrot.slane %v905, 4
  %v907 = vadd.f32 %v905, %v906
  %v908 = vrot.slane %v907, 2
  %v909 = vadd.f32 %v907, %v908
  %v910 = vrot.slane %v909, 1
  %v911 = vadd.f32 %v909, %v910
  %v912 = vmul.f32 %v897, %v897
  %v913 = vmul.f32 %v898, %v898
  %v914 = vsel %vm460, %v912, 0.0
  %915 = vadd.xlane.f32.xlu0 %v914
  %v916 = vpop.xlane.xlu0 %915
  %v917 = vsel %vm460, %v913, 0.0
  %918 = vadd.xlane.f32.xlu0 %v917
  %v919 = vpop.xlane.xlu0 %918
  %v920 = vadd.f32 %v916, %v919
  %v921 = vrot.slane %v920, 4
  %v922 = vadd.f32 %v920, %v921
  %v923 = vrot.slane %v922, 2
  %v924 = vadd.f32 %v922, %v923
  %v925 = vrot.slane %v924, 1
  %v926 = vadd.f32 %v924, %v925
  %v927 = vmul.f32 %v911, 0.0013020834
  %v928 = vmul.f32 %v926, 0.0013020834
  %v929 = vmul.f32 %v927, %v927
  %v930 = vsub.f32 %v928, %v929
  %v931 = vmax.f32 %v930, 0.0
  %v932 = vsub.f32 %v889, %v927
  %v933 = vsub.f32 %v890, %v927
  %v934 = vadd.f32 %v931, 1e-05
  %v935 = vrsqrt.pop %v934
  %v936 = vmul.f32 %v932, %v935
  %v937 = vmul.f32 %v933, %v935
  %v938 = vmul.f32 %v891, %v896
  %v939 = vmul.f32 %v892, %v896
  %v940 = vsel %vm460, %v938, 0.0
  %941 = vadd.xlane.f32.xlu0 %v940
  %v942 = vpop.xlane.xlu0 %941
  %v943 = vsel %vm460, %v939, 0.0
  %944 = vadd.xlane.f32.xlu0 %v943
  %v945 = vpop.xlane.xlu0 %944
  %v946 = vadd.f32 %v942, %v945
  %v947 = vrot.slane %v946, 4
  %v948 = vadd.f32 %v946, %v947
  %v949 = vrot.slane %v948, 2
  %v950 = vadd.f32 %v948, %v949
  %v951 = vrot.slane %v950, 1
  %v952 = vadd.f32 %v950, %v951
  %v953 = vmul.f32 %v938, %v938
  %v954 = vmul.f32 %v939, %v939
  %v955 = vsel %vm460, %v953, 0.0
  %956 = vadd.xlane.f32.xlu0 %v955
  %v957 = vpop.xlane.xlu0 %956
  %v958 = vsel %vm460, %v954, 0.0
  %959 = vadd.xlane.f32.xlu0 %v958
  %v960 = vpop.xlane.xlu0 %959
  %v961 = vadd.f32 %v957, %v960
  %v962 = vrot.slane %v961, 4
  %v963 = vadd.f32 %v961, %v962
  %v964 = vrot.slane %v963, 2
  %v965 = vadd.f32 %v963, %v964
  %v966 = vrot.slane %v965, 1
  %v967 = vadd.f32 %v965, %v966
  %v968 = vmul.f32 %v952, 0.0013020834
  %v969 = vmul.f32 %v967, 0.0013020834
  %v970 = vmul.f32 %v968, %v968
  %v971 = vsub.f32 %v969, %v970
  %v972 = vmax.f32 %v971, 0.0
  %v973 = vsub.f32 %v891, %v968
  %v974 = vsub.f32 %v892, %v968
  %v975 = vadd.f32 %v972, 1e-05
  %v976 = vrsqrt.pop %v975
  %v977 = vmul.f32 %v973, %v976
  %v978 = vmul.f32 %v974, %v976
  %v979 = vld [vmem:[%s1 + $0x140] sm:$0xff]
  %v980 = vld [vmem:[%s1 + $0x148] sm:$0xff]
  %v981 = vld [vmem:[%s1 + $0x150] sm:$0xff]
  %v982 = vld [vmem:[%s1 + $0x158] sm:$0xff]
  %v983 = vmul.f32 %v936, %v979
  %v984 = vmul.f32 %v937, %v980
  %v985 = vmul.f32 %v977, %v981
  %v986 = vmul.f32 %v978, %v982
  %v987 = vld [vmem:[%s1 + $0x160] sm:$0xff]
  %v988 = vld [vmem:[%s1 + $0x168] sm:$0xff]
  %v989 = vld [vmem:[%s1 + $0x170] sm:$0xff]
  %v990 = vld [vmem:[%s1 + $0x178] sm:$0xff]
  %v991 = vadd.f32 %v983, %v987
  %v992 = vadd.f32 %v984, %v988
  %v993 = vadd.f32 %v985, %v989
  %v994 = vadd.f32 %v986, %v990
  %v995 = vld [vmem:[%s1 + $0x180] sm:$0xff]
  %v996 = vld [vmem:[%s1 + $0x188] sm:$0xff]
  %v997 = vld [vmem:[%s1 + $0x190] sm:$0xff]
  %v998 = vld [vmem:[%s1 + $0x198] sm:$0xff]
  %v999 = vld [vmem:[%s1 + $0x1a0] sm:$0xff]
  %v1000 = vld [vmem:[%s1 + $0x1a8] sm:$0xff]
  %v1001 = vld [vmem:[%s1 + $0x1b0] sm:$0xff]
  %v1002 = vld [vmem:[%s1 + $0x1b8] sm:$0xff]
  %v1003 = vld [vmem:[%s1 + $0x1c0] sm:$0xff]
  %v1004 = vld [vmem:[%s1 + $0x1c8] sm:$0xff]
  %v1005 = vld [vmem:[%s1 + $0x1d0] sm:$0xff]
  %v1006 = vld [vmem:[%s1 + $0x1d8] sm:$0xff]
  %v1007 = vld [vmem:[%s1 + $0x1e0] sm:$0xff]
  %v1008 = vld [vmem:[%s1 + $0x1e8] sm:$0xff]
  %v1009 = vld [vmem:[%s1 + $0x1f0] sm:$0xff]
  %v1010 = vld [vmem:[%s1 + $0x1f8] sm:$0xff]
  %v1011 = vlaneseq
  %v1012 = vshrl.u32 %v1011, 7
  %v1013 = vsub.s32 6, %v1012
  %v1014 = vrot.slane %v17, %v1013
  %v1016 = vsel %vm460, %v991, 0
  %v1019 = vsel %vm460, %v992, 0
  %v1022 = vsel %vm460, %v993, 0
  %v1025 = vsel %vm460, %v994, 0
  %1027 = vmatprep.subr.mxu0 0.0
  %1028 = vmatpush1.msra.mxu0 %v995
  %1029 = vmatprep.subr.mxu0 0.0
  %1030 = vmatpush1.msra.mxu0 %v996
  %1031 = vmatprep.subr.mxu0 0.0
  %1032 = vmatpush1.msra.mxu0 %v997
  %1033 = vmatprep.subr.mxu0 0.0
  %1034 = vmatpush1.msra.mxu0 %v998
  %1035 = vmatprep.subr.mxu0 0.0
  %1036 = vmatpush1.msra.mxu0 %v999
  %1037 = vmatprep.subr.mxu0 0.0
  %1038 = vmatpush1.msra.mxu0 %v1000
  %1039 = vmatprep.subr.mxu0 0.0
  %1040 = vmatpush1.msra.mxu0 %v1001
  %1041 = vmatprep.subr.mxu0 0.0
  %1042 = vmatpush1.msra.mxu0 %v1002
  %1043 = vmatprep.subr.mxu0 0.0
  %1044 = vmatpush1.msra.mxu0 0.0
  %1045 = vmatprep.subr.mxu0 0.0
  %1046 = vmatpush1.msra.mxu0 0.0
  %1047 = vmatprep.subr.mxu0 0.0
  %1048 = vmatpush1.msra.mxu0 0.0
  %1049 = vmatprep.subr.mxu0 0.0
  %1050 = vmatpush1.msra.mxu0 0.0
  %1051 = vmatprep.subr.mxu0 0.0
  %1052 = vmatpush1.msra.mxu0 0.0
  %1053 = vmatprep.subr.mxu0 0.0
  %1054 = vmatpush1.msra.mxu0 0.0
  %1055 = vmatprep.subr.mxu0 0.0
  %1056 = vmatpush1.msra.mxu0 0.0
  %1057 = vmatprep.subr.mxu0 0.0
  %1058 = vmatpush1.msra.mxu0 0.0
  %1059 = vmatprep.subr.mxu0 0.0
  %1060 = vmatpush1.msra.mxu0 0.0
  %1061 = vmatprep.subr.mxu0 0.0
  %1062 = vmatpush1.msra.mxu0 0.0
  %1063 = vmatprep.subr.mxu0 0.0
  %1064 = vmatpush1.msra.mxu0 0.0
  %1065 = vmatprep.subr.mxu0 0.0
  %1066 = vmatpush1.msra.mxu0 0.0
  %1067 = vmatprep.subr.mxu0 0.0
  %1068 = vmatpush1.msra.mxu0 0.0
  %1069 = vmatprep.subr.mxu0 0.0
  %1070 = vmatpush1.msra.mxu0 0.0
  %1071 = vmatprep.subr.mxu0 0.0
  %1072 = vmatpush1.msra.mxu0 0.0
  %1073 = vmatprep.subr.mxu0 0.0
  %1074 = vmatpush1.msra.mxu0 0.0
  %1075 = vmatprep.subr.mxu0 0.0
  %1076 = vmatpush1.msra.mxu0 0.0
  %1077 = vmatprep.subr.mxu0 0.0
  %1078 = vmatpush1.msra.mxu0 0.0
  %1079 = vmatprep.subr.mxu0 0.0
  %1080 = vmatpush1.msra.mxu0 0.0
  %1081 = vmatprep.subr.mxu0 0.0
  %1082 = vmatpush1.msra.mxu0 0.0
  %1083 = vmatprep.subr.mxu0 0.0
  %1084 = vmatpush1.msra.mxu0 0.0
  %1085 = vmatprep.subr.mxu0 0.0
  %1086 = vmatpush1.msra.mxu0 0.0
  %1087 = vmatprep.subr.mxu0 0.0
  %1088 = vmatpush1.msra.mxu0 0.0
  %1089 = vmatprep.subr.mxu0 0.0
  %1090 = vmatpush1.msra.mxu0 0.0
  %1091 = vmatprep.mubr.f32.mxu0 0.0
  %1092 = vmatmul.mubr.f32.gmra.mrb[0].mxu0 %v1016
  %v1093 = vpop.f32.mrb[0].mxu0
  %v1094 = vadd.f32 %v1014, %v1093
  %v1095 = vpop.f32.mrb[0].mxu0
  %1096 = vmatprep.mubr.f32.mxu0 0.0
  %1097 = vmatmul.mubr.f32.gmra.mrb[0].mxu0 %v1019
  %v1098 = vpop.f32.mrb[0].mxu0
  %v1099 = vadd.f32 %v1014, %v1098
  %v1100 = vpop.f32.mrb[0].mxu0
  %1101 = vmatprep.mubr.f32.mxu0 0.0
  %1102 = vmatmul.mubr.f32.gmra.mrb[0].mxu0 %v1022
  %v1103 = vpop.f32.mrb[0].mxu0
  %v1104 = vadd.f32 %v1014, %v1103
  %v1105 = vpop.f32.mrb[0].mxu0
  %1106 = vmatprep.mubr.f32.mxu0 0.0
  %1107 = vmatmul.mubr.f32.gmra.mrb[0].mxu0 %v1025
  %v1108 = vpop.f32.mrb[0].mxu0
  %v1109 = vadd.f32 %v1014, %v1108
  %v1110 = vpop.f32.mrb[0].mxu0
  %1111 = vdwg.mxu0
  %v1112 = vlaneseq
  %v1113 = vshrl.u32 %v1112, 7
  %v1114 = vsub.s32 7, %v1113
  %v1115 = vrot.slane %v17, %v1114
  %1116 = vmatprep.subr.mxu0 0.0
  %1117 = vmatpush1.msra.mxu0 %v1003
  %1118 = vmatprep.subr.mxu0 0.0
  %1119 = vmatpush1.msra.mxu0 %v1004
  %1120 = vmatprep.subr.mxu0 0.0
  %1121 = vmatpush1.msra.mxu0 %v1005
  %1122 = vmatprep.subr.mxu0 0.0
  %1123 = vmatpush1.msra.mxu0 %v1006
  %1124 = vmatprep.subr.mxu0 0.0
  %1125 = vmatpush1.msra.mxu0 %v1007
  %1126 = vmatprep.subr.mxu0 0.0
  %1127 = vmatpush1.msra.mxu0 %v1008
  %1128 = vmatprep.subr.mxu0 0.0
  %1129 = vmatpush1.msra.mxu0 %v1009
  %1130 = vmatprep.subr.mxu0 0.0
  %1131 = vmatpush1.msra.mxu0 %v1010
  %1132 = vmatprep.subr.mxu0 0.0
  %1133 = vmatpush1.msra.mxu0 0.0
  %1134 = vmatprep.subr.mxu0 0.0
  %1135 = vmatpush1.msra.mxu0 0.0
  %1136 = vmatprep.subr.mxu0 0.0
  %1137 = vmatpush1.msra.mxu0 0.0
  %1138 = vmatprep.subr.mxu0 0.0
  %1139 = vmatpush1.msra.mxu0 0.0
  %1140 = vmatprep.subr.mxu0 0.0
  %1141 = vmatpush1.msra.mxu0 0.0
  %1142 = vmatprep.subr.mxu0 0.0
  %1143 = vmatpush1.msra.mxu0 0.0
  %1144 = vmatprep.subr.mxu0 0.0
  %1145 = vmatpush1.msra.mxu0 0.0
  %1146 = vmatprep.subr.mxu0 0.0
  %1147 = vmatpush1.msra.mxu0 0.0
  %1148 = vmatprep.subr.mxu0 0.0
  %1149 = vmatpush1.msra.mxu0 0.0
  %1150 = vmatprep.subr.mxu0 0.0
  %1151 = vmatpush1.msra.mxu0 0.0
  %1152 = vmatprep.subr.mxu0 0.0
  %1153 = vmatpush1.msra.mxu0 0.0
  %1154 = vmatprep.subr.mxu0 0.0
  %1155 = vmatpush1.msra.mxu0 0.0
  %1156 = vmatprep.subr.mxu0 0.0
  %1157 = vmatpush1.msra.mxu0 0.0
  %1158 = vmatprep.subr.mxu0 0.0
  %1159 = vmatpush1.msra.mxu0 0.0
  %1160 = vmatprep.subr.mxu0 0.0
  %1161 = vmatpush1.msra.mxu0 0.0
  %1162 = vmatprep.subr.mxu0 0.0
  %1163 = vmatpush1.msra.mxu0 0.0
  %1164 = vmatprep.subr.mxu0 0.0
  %1165 = vmatpush1.msra.mxu0 0.0
  %1166 = vmatprep.subr.mxu0 0.0
  %1167 = vmatpush1.msra.mxu0 0.0
  %1168 = vmatprep.subr.mxu0 0.0
  %1169 = vmatpush1.msra.mxu0 0.0
  %1170 = vmatprep.subr.mxu0 0.0
  %1171 = vmatpush1.msra.mxu0 0.0
  %1172 = vmatprep.subr.mxu0 0.0
  %1173 = vmatpush1.msra.mxu0 0.0
  %1174 = vmatprep.subr.mxu0 0.0
  %1175 = vmatpush1.msra.mxu0 0.0
  %1176 = vmatprep.subr.mxu0 0.0
  %1177 = vmatpush1.msra.mxu0 0.0
  %1178 = vmatprep.subr.mxu0 0.0
  %1179 = vmatpush1.msra.mxu0 0.0
  %1180 = vmatprep.mubr.f32.mxu0 0.0
  %1181 = vmatmul.mubr.f32.gmra.mrb[0].mxu0 %v1016
  %v1182 = vpop.f32.mrb[0].mxu0
  %v1183 = vadd.f32 %v1115, %v1182
  %v1184 = vpop.f32.mrb[0].mxu0
  %1185 = vmatprep.mubr.f32.mxu0 0.0
  %1186 = vmatmul.mubr.f32.gmra.mrb[0].mxu0 %v1019
  %v1187 = vpop.f32.mrb[0].mxu0
  %v1188 = vadd.f32 %v1115, %v1187
  %v1189 = vpop.f32.mrb[0].mxu0
  %1190 = vmatprep.mubr.f32.mxu0 0.0
  %1191 = vmatmul.mubr.f32.gmra.mrb[0].mxu0 %v1022
  %v1192 = vpop.f32.mrb[0].mxu0
  %v1193 = vadd.f32 %v1115, %v1192
  %v1194 = vpop.f32.mrb[0].mxu0
  %1195 = vmatprep.mubr.f32.mxu0 0.0
  %1196 = vmatmul.mubr.f32.gmra.mrb[0].mxu0 %v1025
  %v1197 = vpop.f32.mrb[0].mxu0
  %v1198 = vadd.f32 %v1115, %v1197
  %v1199 = vpop.f32.mrb[0].mxu0
  %1200 = vdwg.mxu0
  %v1201 = vmul.f32 %v1183, 0.5
  %v1202 = vmul.f32 %v1188, 0.5
  %v1203 = vmul.f32 %v1193, 0.5
  %v1204 = vmul.f32 %v1198, 0.5
  %v1205 = vtanh.pop %v1201
  %v1206 = vtanh.pop %v1202
  %v1207 = vtanh.pop %v1203
  %v1208 = vtanh.pop %v1204
  %v1209 = vmul.f32 %v1205, 0.5
  %v1210 = vmul.f32 %v1206, 0.5
  %v1211 = vmul.f32 %v1207, 0.5
  %v1212 = vmul.f32 %v1208, 0.5
  %v1213 = vadd.f32 %v1209, 0.5
  %v1214 = vadd.f32 %v1210, 0.5
  %v1215 = vadd.f32 %v1211, 0.5
  %v1216 = vadd.f32 %v1212, 0.5
  %v1217 = vmul.f32 %v1094, %v1213
  %v1218 = vmul.f32 %v1099, %v1214
  %v1219 = vmul.f32 %v1104, %v1215
  %v1220 = vmul.f32 %v1109, %v1216
  %1221 = vmatprep.subr.mxu0 0.0
  %1222 = vmatpush1.msra.mxu0 %v1217
  %1223 = vmatprep.subr.mxu0 0.0
  %1224 = vmatpush1.msra.mxu0 %v1218
  %1225 = vmatprep.subr.mxu0 0.0
  %1226 = vmatpush1.msra.mxu0 %v1219
  %1227 = vmatprep.subr.mxu0 0.0
  %1228 = vmatpush1.msra.mxu0 %v1220
  %1229 = vmatprep.subr.mxu0 0.0
  %1230 = vmatpush1.msra.mxu0 0.0
  %1231 = vmatprep.subr.mxu0 0.0
  %1232 = vmatpush1.msra.mxu0 0.0
  %1233 = vmatprep.subr.mxu0 0.0
  %1234 = vmatpush1.msra.mxu0 0.0
  %1235 = vmatprep.subr.mxu0 0.0
  %1236 = vmatpush1.msra.mxu0 0.0
  %1237 = vmatprep.subr.mxu0 0.0
  %1238 = vmatpush1.msra.mxu0 0.0
  %1239 = vmatprep.subr.mxu0 0.0
  %1240 = vmatpush1.msra.mxu0 0.0
  %1241 = vmatprep.subr.mxu0 0.0
  %1242 = vmatpush1.msra.mxu0 0.0
  %1243 = vmatprep.subr.mxu0 0.0
  %1244 = vmatpush1.msra.mxu0 0.0
  %1245 = vmatprep.subr.mxu0 0.0
  %1246 = vmatpush1.msra.mxu0 0.0
  %1247 = vmatprep.subr.mxu0 0.0
  %1248 = vmatpush1.msra.mxu0 0.0
  %1249 = vmatprep.subr.mxu0 0.0
  %1250 = vmatpush1.msra.mxu0 0.0
  %1251 = vmatprep.subr.mxu0 0.0
  %1252 = vmatpush1.msra.mxu0 0.0
  %1253 = vmatprep.subr.mxu0 0.0
  %1254 = vmatpush1.msra.mxu0 0.0
  %1255 = vmatprep.subr.mxu0 0.0
  %1256 = vmatpush1.msra.mxu0 0.0
  %1257 = vmatprep.subr.mxu0 0.0
  %1258 = vmatpush1.msra.mxu0 0.0
  %1259 = vmatprep.subr.mxu0 0.0
  %1260 = vmatpush1.msra.mxu0 0.0
  %1261 = vmatprep.subr.mxu0 0.0
  %1262 = vmatpush1.msra.mxu0 0.0
  %1263 = vmatprep.subr.mxu0 0.0
  %1264 = vmatpush1.msra.mxu0 0.0
  %1265 = vmatprep.subr.mxu0 0.0
  %1266 = vmatpush1.msra.mxu0 0.0
  %1267 = vmatprep.subr.mxu0 0.0
  %1268 = vmatpush1.msra.mxu0 0.0
  %1269 = vmatprep.subr.mxu0 0.0
  %1270 = vmatpush1.msra.mxu0 0.0
  %1271 = vmatprep.subr.mxu0 0.0
  %1272 = vmatpush1.msra.mxu0 0.0
  %1273 = vmatprep.subr.mxu0 0.0
  %1274 = vmatpush1.msra.mxu0 0.0
  %1275 = vmatprep.subr.mxu0 0.0
  %1276 = vmatpush1.msra.mxu0 0.0
  %1277 = vmatprep.subr.mxu0 0.0
  %1278 = vmatpush1.msra.mxu0 0.0
  %1279 = vmatprep.subr.mxu0 0.0
  %1280 = vmatpush1.msra.mxu0 0.0
  %1281 = vmatprep.subr.mxu0 0.0
  %1282 = vmatpush1.msra.mxu0 0.0
  %1283 = vmatprep.subr.mxu0 0.0
  %1284 = vmatpush1.msra.mxu0 0.0
  %1285 = vmatprep.mubr.f32.mxu0 0.0
  %1286 = vmatmul.mubr.f32.gmra.mrb[0].mxu0 %v247
  %v1287 = vpop.f32.mrb[0].mxu0
  %v1288 = vadd.f32 0.0, %v1287
  %v1289 = vpop.f32.mrb[0].mxu0
  %1290 = vmatprep.mubr.f32.mxu0 0.0
  %1291 = vmatmul.mubr.f32.gmra.mrb[0].mxu0 %v250
  %v1292 = vpop.f32.mrb[0].mxu0
  %v1293 = vadd.f32 0.0, %v1292
  %v1294 = vpop.f32.mrb[0].mxu0
  %1295 = vmatprep.mubr.f32.mxu0 0.0
  %1296 = vmatmul.mubr.f32.gmra.mrb[0].mxu0 %v253
  %v1297 = vpop.f32.mrb[0].mxu0
  %v1298 = vadd.f32 0.0, %v1297
  %v1299 = vpop.f32.mrb[0].mxu0
  %1300 = vmatprep.mubr.f32.mxu0 0.0
  %1301 = vmatmul.mubr.f32.gmra.mrb[0].mxu0 %v256
  %v1302 = vpop.f32.mrb[0].mxu0
  %v1303 = vadd.f32 0.0, %v1302
  %v1304 = vpop.f32.mrb[0].mxu0
  %1305 = vdwg.mxu0
  %v1306 = vld [vmem:[%s1 + $0x200] sm:$0xff]
  %v1307 = vld [vmem:[%s1 + $0x208] sm:$0xff]
  %v1308 = vld [vmem:[%s1 + $0x210] sm:$0xff]
  %v1309 = vld [vmem:[%s1 + $0x218] sm:$0xff]
  %v1310 = vld [vmem:[%s1 + $0x220] sm:$0xff]
  %v1311 = vld [vmem:[%s1 + $0x228] sm:$0xff]
  %v1312 = vld [vmem:[%s1 + $0x230] sm:$0xff]
  %v1313 = vld [vmem:[%s1 + $0x238] sm:$0xff]
  %1314 = vmatprep.subr.mxu0 0.0
  %1315 = vmatpush1.msra.mxu0 %v1217
  %1316 = vmatprep.subr.mxu0 0.0
  %1317 = vmatpush1.msra.mxu0 %v1218
  %1318 = vmatprep.subr.mxu0 0.0
  %1319 = vmatpush1.msra.mxu0 %v1219
  %1320 = vmatprep.subr.mxu0 0.0
  %1321 = vmatpush1.msra.mxu0 %v1220
  %1322 = vmatprep.subr.mxu0 0.0
  %1323 = vmatpush1.msra.mxu0 0.0
  %1324 = vmatprep.subr.mxu0 0.0
  %1325 = vmatpush1.msra.mxu0 0.0
  %1326 = vmatprep.subr.mxu0 0.0
  %1327 = vmatpush1.msra.mxu0 0.0
  %1328 = vmatprep.subr.mxu0 0.0
  %1329 = vmatpush1.msra.mxu0 0.0
  %1330 = vmatprep.subr.mxu0 0.0
  %1331 = vmatpush1.msra.mxu0 0.0
  %1332 = vmatprep.subr.mxu0 0.0
  %1333 = vmatpush1.msra.mxu0 0.0
  %1334 = vmatprep.subr.mxu0 0.0
  %1335 = vmatpush1.msra.mxu0 0.0
  %1336 = vmatprep.subr.mxu0 0.0
  %1337 = vmatpush1.msra.mxu0 0.0
  %1338 = vmatprep.subr.mxu0 0.0
  %1339 = vmatpush1.msra.mxu0 0.0
  %1340 = vmatprep.subr.mxu0 0.0
  %1341 = vmatpush1.msra.mxu0 0.0
  %1342 = vmatprep.subr.mxu0 0.0
  %1343 = vmatpush1.msra.mxu0 0.0
  %1344 = vmatprep.subr.mxu0 0.0
  %1345 = vmatpush1.msra.mxu0 0.0
  %1346 = vmatprep.subr.mxu0 0.0
  %1347 = vmatpush1.msra.mxu0 0.0
  %1348 = vmatprep.subr.mxu0 0.0
  %1349 = vmatpush1.msra.mxu0 0.0
  %1350 = vmatprep.subr.mxu0 0.0
  %1351 = vmatpush1.msra.mxu0 0.0
  %1352 = vmatprep.subr.mxu0 0.0
  %1353 = vmatpush1.msra.mxu0 0.0
  %1354 = vmatprep.subr.mxu0 0.0
  %1355 = vmatpush1.msra.mxu0 0.0
  %1356 = vmatprep.subr.mxu0 0.0
  %1357 = vmatpush1.msra.mxu0 0.0
  %1358 = vmatprep.subr.mxu0 0.0
  %1359 = vmatpush1.msra.mxu0 0.0
  %1360 = vmatprep.subr.mxu0 0.0
  %1361 = vmatpush1.msra.mxu0 0.0
  %1362 = vmatprep.subr.mxu0 0.0
  %1363 = vmatpush1.msra.mxu0 0.0
  %1364 = vmatprep.subr.mxu0 0.0
  %1365 = vmatpush1.msra.mxu0 0.0
  %1366 = vmatprep.subr.mxu0 0.0
  %1367 = vmatpush1.msra.mxu0 0.0
  %1368 = vmatprep.subr.mxu0 0.0
  %1369 = vmatpush1.msra.mxu0 0.0
  %1370 = vmatprep.subr.mxu0 0.0
  %1371 = vmatpush1.msra.mxu0 0.0
  %1372 = vmatprep.subr.mxu0 0.0
  %1373 = vmatpush1.msra.mxu0 0.0
  %1374 = vmatprep.subr.mxu0 0.0
  %1375 = vmatpush1.msra.mxu0 0.0
  %1376 = vmatprep.subr.mxu0 0.0
  %1377 = vmatpush1.msra.mxu0 0.0
  %1378 = vmatprep.mubr.f32.mxu0 0.0
  %1379 = vmatmul.mubr.f32.gmra.mrb[0].mxu0 %v356
  %v1380 = vpop.f32.mrb[0].mxu0
  %v1381 = vadd.f32 0.0, %v1380
  %v1382 = vpop.f32.mrb[0].mxu0
  %1383 = vmatprep.mubr.f32.mxu0 0.0
  %1384 = vmatmul.mubr.f32.gmra.mrb[0].mxu0 %v359
  %v1385 = vpop.f32.mrb[0].mxu0
  %v1386 = vadd.f32 0.0, %v1385
  %v1387 = vpop.f32.mrb[0].mxu0
  %1388 = vmatprep.mubr.f32.mxu0 0.0
  %1389 = vmatmul.mubr.f32.gmra.mrb[0].mxu0 %v362
  %v1390 = vpop.f32.mrb[0].mxu0
  %v1391 = vadd.f32 0.0, %v1390
  %v1392 = vpop.f32.mrb[0].mxu0
  %1393 = vmatprep.mubr.f32.mxu0 0.0
  %1394 = vmatmul.mubr.f32.gmra.mrb[0].mxu0 %v365
  %v1395 = vpop.f32.mrb[0].mxu0
  %v1396 = vadd.f32 0.0, %v1395
  %v1397 = vpop.f32.mrb[0].mxu0
  %1398 = vdwg.mxu0
  %v1399 = vld [vmem:[%s1 + $0x240] sm:$0xff]
  %v1400 = vld [vmem:[%s1 + $0x248] sm:$0xff]
  %v1401 = vld [vmem:[%s1 + $0x250] sm:$0xff]
  %v1402 = vld [vmem:[%s1 + $0x258] sm:$0xff]
  %v1403 = vld [vmem:[%s1 + $0x260] sm:$0xff]
  %v1404 = vld [vmem:[%s1 + $0x268] sm:$0xff]
  %v1405 = vld [vmem:[%s1 + $0x270] sm:$0xff]
  %v1406 = vld [vmem:[%s1 + $0x278] sm:$0xff]
  %v1408 = vsel %vm460, %v1381, 0
  %v1411 = vsel %vm460, %v1386, 0
  %v1414 = vsel %vm460, %v1391, 0
  %v1417 = vsel %vm460, %v1396, 0
  %1419 = vmatprep.subr.mxu0 0.0
  %1420 = vmatpush1.msra.mxu0 %v1399
  %1421 = vmatprep.subr.mxu0 0.0
  %1422 = vmatpush1.msra.mxu0 %v1400
  %1423 = vmatprep.subr.mxu0 0.0
  %1424 = vmatpush1.msra.mxu0 %v1401
  %1425 = vmatprep.subr.mxu0 0.0
  %1426 = vmatpush1.msra.mxu0 %v1402
  %1427 = vmatprep.subr.mxu0 0.0
  %1428 = vmatpush1.msra.mxu0 %v1403
  %1429 = vmatprep.subr.mxu0 0.0
  %1430 = vmatpush1.msra.mxu0 %v1404
  %1431 = vmatprep.subr.mxu0 0.0
  %1432 = vmatpush1.msra.mxu0 %v1405
  %1433 = vmatprep.subr.mxu0 0.0
  %1434 = vmatpush1.msra.mxu0 %v1406
  %1435 = vmatprep.subr.mxu0 0.0
  %1436 = vmatpush1.msra.mxu0 0.0
  %1437 = vmatprep.subr.mxu0 0.0
  %1438 = vmatpush1.msra.mxu0 0.0
  %1439 = vmatprep.subr.mxu0 0.0
  %1440 = vmatpush1.msra.mxu0 0.0
  %1441 = vmatprep.subr.mxu0 0.0
  %1442 = vmatpush1.msra.mxu0 0.0
  %1443 = vmatprep.subr.mxu0 0.0
  %1444 = vmatpush1.msra.mxu0 0.0
  %1445 = vmatprep.subr.mxu0 0.0
  %1446 = vmatpush1.msra.mxu0 0.0
  %1447 = vmatprep.subr.mxu0 0.0
  %1448 = vmatpush1.msra.mxu0 0.0
  %1449 = vmatprep.subr.mxu0 0.0
  %1450 = vmatpush1.msra.mxu0 0.0
  %1451 = vmatprep.subr.mxu0 0.0
  %1452 = vmatpush1.msra.mxu0 0.0
  %1453 = vmatprep.subr.mxu0 0.0
  %1454 = vmatpush1.msra.mxu0 0.0
  %1455 = vmatprep.subr.mxu0 0.0
  %1456 = vmatpush1.msra.mxu0 0.0
  %1457 = vmatprep.subr.mxu0 0.0
  %1458 = vmatpush1.msra.mxu0 0.0
  %1459 = vmatprep.subr.mxu0 0.0
  %1460 = vmatpush1.msra.mxu0 0.0
  %1461 = vmatprep.subr.mxu0 0.0
  %1462 = vmatpush1.msra.mxu0 0.0
  %1463 = vmatprep.subr.mxu0 0.0
  %1464 = vmatpush1.msra.mxu0 0.0
  %1465 = vmatprep.subr.mxu0 0.0
  %1466 = vmatpush1.msra.mxu0 0.0
  %1467 = vmatprep.subr.mxu0 0.0
  %1468 = vmatpush1.msra.mxu0 0.0
  %1469 = vmatprep.subr.mxu0 0.0
  %1470 = vmatpush1.msra.mxu0 0.0
  %1471 = vmatprep.subr.mxu0 0.0
  %1472 = vmatpush1.msra.mxu0 0.0
  %1473 = vmatprep.subr.mxu0 0.0
  %1474 = vmatpush1.msra.mxu0 0.0
  %1475 = vmatprep.subr.mxu0 0.0
  %1476 = vmatpush1.msra.mxu0 0.0
  %1477 = vmatprep.subr.mxu0 0.0
  %1478 = vmatpush1.msra.mxu0 0.0
  %1479 = vmatprep.subr.mxu0 0.0
  %1480 = vmatpush1.msra.mxu0 0.0
  %1481 = vmatprep.subr.mxu0 0.0
  %1482 = vmatpush1.msra.mxu0 0.0
  %1483 = vmatprep.mubr.f32.mxu0 0.0
  %1484 = vmatmul.mubr.f32.gmra.mrb[0].mxu0 %v1408
  %v1485 = vpop.f32.mrb[0].mxu0
  %v1486 = vadd.f32 0.0, %v1485
  %v1487 = vpop.f32.mrb[0].mxu0
  %1488 = vmatprep.mubr.f32.mxu0 0.0
  %1489 = vmatmul.mubr.f32.gmra.mrb[0].mxu0 %v1411
  %v1490 = vpop.f32.mrb[0].mxu0
  %v1491 = vadd.f32 0.0, %v1490
  %v1492 = vpop.f32.mrb[0].mxu0
  %1493 = vmatprep.mubr.f32.mxu0 0.0
  %1494 = vmatmul.mubr.f32.gmra.mrb[0].mxu0 %v1414
  %v1495 = vpop.f32.mrb[0].mxu0
  %v1496 = vadd.f32 0.0, %v1495
  %v1497 = vpop.f32.mrb[0].mxu0
  %1498 = vmatprep.mubr.f32.mxu0 0.0
  %1499 = vmatmul.mubr.f32.gmra.mrb[0].mxu0 %v1417
  %v1500 = vpop.f32.mrb[0].mxu0
  %v1501 = vadd.f32 0.0, %v1500
  %v1502 = vpop.f32.mrb[0].mxu0
  %1503 = vdwg.mxu0
  %v1505 = vsel %vm460, %v1288, 0
  %v1508 = vsel %vm460, %v1293, 0
  %v1511 = vsel %vm460, %v1298, 0
  %v1514 = vsel %vm460, %v1303, 0
  %1516 = vmatprep.subr.mxu0 0.0
  %1517 = vmatpush1.msra.mxu0 %v1306
  %1518 = vmatprep.subr.mxu0 0.0
  %1519 = vmatpush1.msra.mxu0 %v1307
  %1520 = vmatprep.subr.mxu0 0.0
  %1521 = vmatpush1.msra.mxu0 %v1308
  %1522 = vmatprep.subr.mxu0 0.0
  %1523 = vmatpush1.msra.mxu0 %v1309
  %1524 = vmatprep.subr.mxu0 0.0
  %1525 = vmatpush1.msra.mxu0 %v1310
  %1526 = vmatprep.subr.mxu0 0.0
  %1527 = vmatpush1.msra.mxu0 %v1311
  %1528 = vmatprep.subr.mxu0 0.0
  %1529 = vmatpush1.msra.mxu0 %v1312
  %1530 = vmatprep.subr.mxu0 0.0
  %1531 = vmatpush1.msra.mxu0 %v1313
  %1532 = vmatprep.subr.mxu0 0.0
  %1533 = vmatpush1.msra.mxu0 0.0
  %1534 = vmatprep.subr.mxu0 0.0
  %1535 = vmatpush1.msra.mxu0 0.0
  %1536 = vmatprep.subr.mxu0 0.0
  %1537 = vmatpush1.msra.mxu0 0.0
  %1538 = vmatprep.subr.mxu0 0.0
  %1539 = vmatpush1.msra.mxu0 0.0
  %1540 = vmatprep.subr.mxu0 0.0
  %1541 = vmatpush1.msra.mxu0 0.0
  %1542 = vmatprep.subr.mxu0 0.0
  %1543 = vmatpush1.msra.mxu0 0.0
  %1544 = vmatprep.subr.mxu0 0.0
  %1545 = vmatpush1.msra.mxu0 0.0
  %1546 = vmatprep.subr.mxu0 0.0
  %1547 = vmatpush1.msra.mxu0 0.0
  %1548 = vmatprep.subr.mxu0 0.0
  %1549 = vmatpush1.msra.mxu0 0.0
  %1550 = vmatprep.subr.mxu0 0.0
  %1551 = vmatpush1.msra.mxu0 0.0
  %1552 = vmatprep.subr.mxu0 0.0
  %1553 = vmatpush1.msra.mxu0 0.0
  %1554 = vmatprep.subr.mxu0 0.0
  %1555 = vmatpush1.msra.mxu0 0.0
  %1556 = vmatprep.subr.mxu0 0.0
  %1557 = vmatpush1.msra.mxu0 0.0
  %1558 = vmatprep.subr.mxu0 0.0
  %1559 = vmatpush1.msra.mxu0 0.0
  %1560 = vmatprep.subr.mxu0 0.0
  %1561 = vmatpush1.msra.mxu0 0.0
  %1562 = vmatprep.subr.mxu0 0.0
  %1563 = vmatpush1.msra.mxu0 0.0
  %1564 = vmatprep.subr.mxu0 0.0
  %1565 = vmatpush1.msra.mxu0 0.0
  %1566 = vmatprep.subr.mxu0 0.0
  %1567 = vmatpush1.msra.mxu0 0.0
  %1568 = vmatprep.subr.mxu0 0.0
  %1569 = vmatpush1.msra.mxu0 0.0
  %1570 = vmatprep.subr.mxu0 0.0
  %1571 = vmatpush1.msra.mxu0 0.0
  %1572 = vmatprep.subr.mxu0 0.0
  %1573 = vmatpush1.msra.mxu0 0.0
  %1574 = vmatprep.subr.mxu0 0.0
  %1575 = vmatpush1.msra.mxu0 0.0
  %1576 = vmatprep.subr.mxu0 0.0
  %1577 = vmatpush1.msra.mxu0 0.0
  %1578 = vmatprep.subr.mxu0 0.0
  %1579 = vmatpush1.msra.mxu0 0.0
  %1580 = vmatprep.mubr.f32.mxu0 0.0
  %1581 = vmatmul.mubr.f32.gmra.mrb[0].mxu0 %v1505
  %v1582 = vpop.f32.mrb[0].mxu0
  %v1583 = vadd.f32 %v1486, %v1582
  %v1584 = vpop.f32.mrb[0].mxu0
  %1585 = vmatprep.mubr.f32.mxu0 0.0
  %1586 = vmatmul.mubr.f32.gmra.mrb[0].mxu0 %v1508
  %v1587 = vpop.f32.mrb[0].mxu0
  %v1588 = vadd.f32 %v1491, %v1587
  %v1589 = vpop.f32.mrb[0].mxu0
  %1590 = vmatprep.mubr.f32.mxu0 0.0
  %1591 = vmatmul.mubr.f32.gmra.mrb[0].mxu0 %v1511
  %v1592 = vpop.f32.mrb[0].mxu0
  %v1593 = vadd.f32 %v1496, %v1592
  %v1594 = vpop.f32.mrb[0].mxu0
  %1595 = vmatprep.mubr.f32.mxu0 0.0
  %1596 = vmatmul.mubr.f32.gmra.mrb[0].mxu0 %v1514
  %v1597 = vpop.f32.mrb[0].mxu0
  %v1598 = vadd.f32 %v1501, %v1597
  %v1599 = vpop.f32.mrb[0].mxu0
  %1600 = vdwg.mxu0
  %v1601 = vlaneseq
  %v1602 = vshrl.u32 %v1601, 7
  %v1603 = vsub.s32 0, %v1602
  %v1604 = vrot.slane %v18, %v1603
  %v1605 = vadd.f32 %v1583, %v1604
  %v1606 = vadd.f32 %v1588, %v1604
  %v1607 = vadd.f32 %v1593, %v1604
  %v1608 = vadd.f32 %v1598, %v1604
  %v1609 = vmax.f32 %v1605, 0.0
  %v1610 = vmax.f32 %v1606, 0.0
  %v1611 = vmax.f32 %v1607, 0.0
  %v1612 = vmax.f32 %v1608, 0.0
  %v1613 = vld [vmem:[%s1 + $0x280] sm:$0xff]
  %v1614 = vld [vmem:[%s1 + $0x288] sm:$0xff]
  %v1615 = vld [vmem:[%s1 + $0x290] sm:$0xff]
  %v1616 = vld [vmem:[%s1 + $0x298] sm:$0xff]
  %v1617 = vld [vmem:[%s1 + $0x2a0] sm:$0xff]
  %v1618 = vld [vmem:[%s1 + $0x2a8] sm:$0xff]
  %v1619 = vld [vmem:[%s1 + $0x2b0] sm:$0xff]
  %v1620 = vld [vmem:[%s1 + $0x2b8] sm:$0xff]
  %v1621 = vld [vmem:[%s1 + $0x2c0] sm:$0xff]
  %v1622 = vld [vmem:[%s1 + $0x2c8] sm:$0xff]
  %v1623 = vld [vmem:[%s1 + $0x2d0] sm:$0xff]
  %v1624 = vld [vmem:[%s1 + $0x2d8] sm:$0xff]
  %v1625 = vld [vmem:[%s1 + $0x2e0] sm:$0xff]
  %v1626 = vld [vmem:[%s1 + $0x2e8] sm:$0xff]
  %v1627 = vld [vmem:[%s1 + $0x2f0] sm:$0xff]
  %v1628 = vld [vmem:[%s1 + $0x2f8] sm:$0xff]
  %v1629 = vlaneseq
  %v1630 = vshrl.u32 %v1629, 7
  %v1631 = vsub.s32 1, %v1630
  %v1632 = vrot.slane %v18, %v1631
  %v1634 = vsel %vm460, %v1609, 0
  %v1637 = vsel %vm460, %v1610, 0
  %v1640 = vsel %vm460, %v1611, 0
  %v1643 = vsel %vm460, %v1612, 0
  %1645 = vmatprep.subr.mxu0 0.0
  %1646 = vmatpush1.msra.mxu0 %v1613
  %1647 = vmatprep.subr.mxu0 0.0
  %1648 = vmatpush1.msra.mxu0 %v1614
  %1649 = vmatprep.subr.mxu0 0.0
  %1650 = vmatpush1.msra.mxu0 %v1615
  %1651 = vmatprep.subr.mxu0 0.0
  %1652 = vmatpush1.msra.mxu0 %v1616
  %1653 = vmatprep.subr.mxu0 0.0
  %1654 = vmatpush1.msra.mxu0 %v1617
  %1655 = vmatprep.subr.mxu0 0.0
  %1656 = vmatpush1.msra.mxu0 %v1618
  %1657 = vmatprep.subr.mxu0 0.0
  %1658 = vmatpush1.msra.mxu0 %v1619
  %1659 = vmatprep.subr.mxu0 0.0
  %1660 = vmatpush1.msra.mxu0 %v1620
  %1661 = vmatprep.subr.mxu0 0.0
  %1662 = vmatpush1.msra.mxu0 0.0
  %1663 = vmatprep.subr.mxu0 0.0
  %1664 = vmatpush1.msra.mxu0 0.0
  %1665 = vmatprep.subr.mxu0 0.0
  %1666 = vmatpush1.msra.mxu0 0.0
  %1667 = vmatprep.subr.mxu0 0.0
  %1668 = vmatpush1.msra.mxu0 0.0
  %1669 = vmatprep.subr.mxu0 0.0
  %1670 = vmatpush1.msra.mxu0 0.0
  %1671 = vmatprep.subr.mxu0 0.0
  %1672 = vmatpush1.msra.mxu0 0.0
  %1673 = vmatprep.subr.mxu0 0.0
  %1674 = vmatpush1.msra.mxu0 0.0
  %1675 = vmatprep.subr.mxu0 0.0
  %1676 = vmatpush1.msra.mxu0 0.0
  %1677 = vmatprep.subr.mxu0 0.0
  %1678 = vmatpush1.msra.mxu0 0.0
  %1679 = vmatprep.subr.mxu0 0.0
  %1680 = vmatpush1.msra.mxu0 0.0
  %1681 = vmatprep.subr.mxu0 0.0
  %1682 = vmatpush1.msra.mxu0 0.0
  %1683 = vmatprep.subr.mxu0 0.0
  %1684 = vmatpush1.msra.mxu0 0.0
  %1685 = vmatprep.subr.mxu0 0.0
  %1686 = vmatpush1.msra.mxu0 0.0
  %1687 = vmatprep.subr.mxu0 0.0
  %1688 = vmatpush1.msra.mxu0 0.0
  %1689 = vmatprep.subr.mxu0 0.0
  %1690 = vmatpush1.msra.mxu0 0.0
  %1691 = vmatprep.subr.mxu0 0.0
  %1692 = vmatpush1.msra.mxu0 0.0
  %1693 = vmatprep.subr.mxu0 0.0
  %1694 = vmatpush1.msra.mxu0 0.0
  %1695 = vmatprep.subr.mxu0 0.0
  %1696 = vmatpush1.msra.mxu0 0.0
  %1697 = vmatprep.subr.mxu0 0.0
  %1698 = vmatpush1.msra.mxu0 0.0
  %1699 = vmatprep.subr.mxu0 0.0
  %1700 = vmatpush1.msra.mxu0 0.0
  %1701 = vmatprep.subr.mxu0 0.0
  %1702 = vmatpush1.msra.mxu0 0.0
  %1703 = vmatprep.subr.mxu0 0.0
  %1704 = vmatpush1.msra.mxu0 0.0
  %1705 = vmatprep.subr.mxu0 0.0
  %1706 = vmatpush1.msra.mxu0 0.0
  %1707 = vmatprep.subr.mxu0 0.0
  %1708 = vmatpush1.msra.mxu0 0.0
  %1709 = vmatprep.mubr.f32.mxu0 0.0
  %1710 = vmatmul.mubr.f32.gmra.mrb[0].mxu0 %v1634
  %v1711 = vpop.f32.mrb[0].mxu0
  %v1712 = vadd.f32 %v1632, %v1711
  %v1713 = vpop.f32.mrb[0].mxu0
  %1714 = vmatprep.mubr.f32.mxu0 0.0
  %1715 = vmatmul.mubr.f32.gmra.mrb[0].mxu0 %v1637
  %v1716 = vpop.f32.mrb[0].mxu0
  %v1717 = vadd.f32 %v1632, %v1716
  %v1718 = vpop.f32.mrb[0].mxu0
  %1719 = vmatprep.mubr.f32.mxu0 0.0
  %1720 = vmatmul.mubr.f32.gmra.mrb[0].mxu0 %v1640
  %v1721 = vpop.f32.mrb[0].mxu0
  %v1722 = vadd.f32 %v1632, %v1721
  %v1723 = vpop.f32.mrb[0].mxu0
  %1724 = vmatprep.mubr.f32.mxu0 0.0
  %1725 = vmatmul.mubr.f32.gmra.mrb[0].mxu0 %v1643
  %v1726 = vpop.f32.mrb[0].mxu0
  %v1727 = vadd.f32 %v1632, %v1726
  %v1728 = vpop.f32.mrb[0].mxu0
  %1729 = vdwg.mxu0
  %v1730 = vlaneseq
  %v1731 = vshrl.u32 %v1730, 7
  %v1732 = vsub.s32 2, %v1731
  %v1733 = vrot.slane %v18, %v1732
  %1734 = vmatprep.subr.mxu0 0.0
  %1735 = vmatpush1.msra.mxu0 %v1621
  %1736 = vmatprep.subr.mxu0 0.0
  %1737 = vmatpush1.msra.mxu0 %v1622
  %1738 = vmatprep.subr.mxu0 0.0
  %1739 = vmatpush1.msra.mxu0 %v1623
  %1740 = vmatprep.subr.mxu0 0.0
  %1741 = vmatpush1.msra.mxu0 %v1624
  %1742 = vmatprep.subr.mxu0 0.0
  %1743 = vmatpush1.msra.mxu0 %v1625
  %1744 = vmatprep.subr.mxu0 0.0
  %1745 = vmatpush1.msra.mxu0 %v1626
  %1746 = vmatprep.subr.mxu0 0.0
  %1747 = vmatpush1.msra.mxu0 %v1627
  %1748 = vmatprep.subr.mxu0 0.0
  %1749 = vmatpush1.msra.mxu0 %v1628
  %1750 = vmatprep.subr.mxu0 0.0
  %1751 = vmatpush1.msra.mxu0 0.0
  %1752 = vmatprep.subr.mxu0 0.0
  %1753 = vmatpush1.msra.mxu0 0.0
  %1754 = vmatprep.subr.mxu0 0.0
  %1755 = vmatpush1.msra.mxu0 0.0
  %1756 = vmatprep.subr.mxu0 0.0
  %1757 = vmatpush1.msra.mxu0 0.0
  %1758 = vmatprep.subr.mxu0 0.0
  %1759 = vmatpush1.msra.mxu0 0.0
  %1760 = vmatprep.subr.mxu0 0.0
  %1761 = vmatpush1.msra.mxu0 0.0
  %1762 = vmatprep.subr.mxu0 0.0
  %1763 = vmatpush1.msra.mxu0 0.0
  %1764 = vmatprep.subr.mxu0 0.0
  %1765 = vmatpush1.msra.mxu0 0.0
  %1766 = vmatprep.subr.mxu0 0.0
  %1767 = vmatpush1.msra.mxu0 0.0
  %1768 = vmatprep.subr.mxu0 0.0
  %1769 = vmatpush1.msra.mxu0 0.0
  %1770 = vmatprep.subr.mxu0 0.0
  %1771 = vmatpush1.msra.mxu0 0.0
  %1772 = vmatprep.subr.mxu0 0.0
  %1773 = vmatpush1.msra.mxu0 0.0
  %1774 = vmatprep.subr.mxu0 0.0
  %1775 = vmatpush1.msra.mxu0 0.0
  %1776 = vmatprep.subr.mxu0 0.0
  %1777 = vmatpush1.msra.mxu0 0.0
  %1778 = vmatprep.subr.mxu0 0.0
  %1779 = vmatpush1.msra.mxu0 0.0
  %1780 = vmatprep.subr.mxu0 0.0
  %1781 = vmatpush1.msra.mxu0 0.0
  %1782 = vmatprep.subr.mxu0 0.0
  %1783 = vmatpush1.msra.mxu0 0.0
  %1784 = vmatprep.subr.mxu0 0.0
  %1785 = vmatpush1.msra.mxu0 0.0
  %1786 = vmatprep.subr.mxu0 0.0
  %1787 = vmatpush1.msra.mxu0 0.0
  %1788 = vmatprep.subr.mxu0 0.0
  %1789 = vmatpush1.msra.mxu0 0.0
  %1790 = vmatprep.subr.mxu0 0.0
  %1791 = vmatpush1.msra.mxu0 0.0
  %1792 = vmatprep.subr.mxu0 0.0
  %1793 = vmatpush1.msra.mxu0 0.0
  %1794 = vmatprep.subr.mxu0 0.0
  %1795 = vmatpush1.msra.mxu0 0.0
  %1796 = vmatprep.subr.mxu0 0.0
  %1797 = vmatpush1.msra.mxu0 0.0
  %1798 = vmatprep.mubr.f32.mxu0 0.0
  %1799 = vmatmul.mubr.f32.gmra.mrb[0].mxu0 %v1634
  %v1800 = vpop.f32.mrb[0].mxu0
  %v1801 = vadd.f32 %v1733, %v1800
  %v1802 = vpop.f32.mrb[0].mxu0
  %1803 = vmatprep.mubr.f32.mxu0 0.0
  %1804 = vmatmul.mubr.f32.gmra.mrb[0].mxu0 %v1637
  %v1805 = vpop.f32.mrb[0].mxu0
  %v1806 = vadd.f32 %v1733, %v1805
  %v1807 = vpop.f32.mrb[0].mxu0
  %1808 = vmatprep.mubr.f32.mxu0 0.0
  %1809 = vmatmul.mubr.f32.gmra.mrb[0].mxu0 %v1640
  %v1810 = vpop.f32.mrb[0].mxu0
  %v1811 = vadd.f32 %v1733, %v1810
  %v1812 = vpop.f32.mrb[0].mxu0
  %1813 = vmatprep.mubr.f32.mxu0 0.0
  %1814 = vmatmul.mubr.f32.gmra.mrb[0].mxu0 %v1643
  %v1815 = vpop.f32.mrb[0].mxu0
  %v1816 = vadd.f32 %v1733, %v1815
  %v1817 = vpop.f32.mrb[0].mxu0
  %1818 = vdwg.mxu0
  %v1819 = vmul.f32 %v1801, 0.5
  %v1820 = vmul.f32 %v1806, 0.5
  %v1821 = vmul.f32 %v1811, 0.5
  %v1822 = vmul.f32 %v1816, 0.5
  %v1823 = vtanh.pop %v1819
  %v1824 = vtanh.pop %v1820
  %v1825 = vtanh.pop %v1821
  %v1826 = vtanh.pop %v1822
  %v1827 = vmul.f32 %v1823, 0.5
  %v1828 = vmul.f32 %v1824, 0.5
  %v1829 = vmul.f32 %v1825, 0.5
  %v1830 = vmul.f32 %v1826, 0.5
  %v1831 = vadd.f32 %v1827, 0.5
  %v1832 = vadd.f32 %v1828, 0.5
  %v1833 = vadd.f32 %v1829, 0.5
  %v1834 = vadd.f32 %v1830, 0.5
  %v1835 = vmul.f32 %v1712, %v1831
  %v1836 = vmul.f32 %v1717, %v1832
  %v1837 = vmul.f32 %v1722, %v1833
  %v1838 = vmul.f32 %v1727, %v1834
  %v1839 = vlaneseq
  %v1840 = vshrl.u32 %v1839, 7
  %v1841 = vsub.s32 3, %v1840
  %v1842 = vrot.slane %v18, %v1841
  %v1843 = vmul.f32 %v1835, %v1842
  %v1844 = vmul.f32 %v1836, %v1842
  %v1845 = vsel %vm460, %v1843, 0.0
  %1846 = vadd.xlane.f32.xlu0 %v1845
  %v1847 = vpop.xlane.xlu0 %1846
  %v1848 = vsel %vm460, %v1844, 0.0
  %1849 = vadd.xlane.f32.xlu0 %v1848
  %v1850 = vpop.xlane.xlu0 %1849
  %v1851 = vadd.f32 %v1847, %v1850
  %v1852 = vrot.slane %v1851, 4
  %v1853 = vadd.f32 %v1851, %v1852
  %v1854 = vrot.slane %v1853, 2
  %v1855 = vadd.f32 %v1853, %v1854
  %v1856 = vrot.slane %v1855, 1
  %v1857 = vadd.f32 %v1855, %v1856
  %v1858 = vmul.f32 %v1843, %v1843
  %v1859 = vmul.f32 %v1844, %v1844
  %v1860 = vsel %vm460, %v1858, 0.0
  %1861 = vadd.xlane.f32.xlu0 %v1860
  %v1862 = vpop.xlane.xlu0 %1861
  %v1863 = vsel %vm460, %v1859, 0.0
  %1864 = vadd.xlane.f32.xlu0 %v1863
  %v1865 = vpop.xlane.xlu0 %1864
  %v1866 = vadd.f32 %v1862, %v1865
  %v1867 = vrot.slane %v1866, 4
  %v1868 = vadd.f32 %v1866, %v1867
  %v1869 = vrot.slane %v1868, 2
  %v1870 = vadd.f32 %v1868, %v1869
  %v1871 = vrot.slane %v1870, 1
  %v1872 = vadd.f32 %v1870, %v1871
  %v1873 = vmul.f32 %v1857, 0.001953125
  %v1874 = vmul.f32 %v1872, 0.001953125
  %v1875 = vmul.f32 %v1873, %v1873
  %v1876 = vsub.f32 %v1874, %v1875
  %v1877 = vmax.f32 %v1876, 0.0
  %v1878 = vsub.f32 %v1835, %v1873
  %v1879 = vsub.f32 %v1836, %v1873
  %v1880 = vadd.f32 %v1877, 1e-05
  %v1881 = vrsqrt.pop %v1880
  %v1882 = vmul.f32 %v1878, %v1881
  %v1883 = vmul.f32 %v1879, %v1881
  %v1884 = vmul.f32 %v1837, %v1842
  %v1885 = vmul.f32 %v1838, %v1842
  %v1886 = vsel %vm460, %v1884, 0.0
  %1887 = vadd.xlane.f32.xlu0 %v1886
  %v1888 = vpop.xlane.xlu0 %1887
  %v1889 = vsel %vm460, %v1885, 0.0
  %1890 = vadd.xlane.f32.xlu0 %v1889
  %v1891 = vpop.xlane.xlu0 %1890
  %v1892 = vadd.f32 %v1888, %v1891
  %v1893 = vrot.slane %v1892, 4
  %v1894 = vadd.f32 %v1892, %v1893
  %v1895 = vrot.slane %v1894, 2
  %v1896 = vadd.f32 %v1894, %v1895
  %v1897 = vrot.slane %v1896, 1
  %v1898 = vadd.f32 %v1896, %v1897
  %v1899 = vmul.f32 %v1884, %v1884
  %v1900 = vmul.f32 %v1885, %v1885
  %v1901 = vsel %vm460, %v1899, 0.0
  %1902 = vadd.xlane.f32.xlu0 %v1901
  %v1903 = vpop.xlane.xlu0 %1902
  %v1904 = vsel %vm460, %v1900, 0.0
  %1905 = vadd.xlane.f32.xlu0 %v1904
  %v1906 = vpop.xlane.xlu0 %1905
  %v1907 = vadd.f32 %v1903, %v1906
  %v1908 = vrot.slane %v1907, 4
  %v1909 = vadd.f32 %v1907, %v1908
  %v1910 = vrot.slane %v1909, 2
  %v1911 = vadd.f32 %v1909, %v1910
  %v1912 = vrot.slane %v1911, 1
  %v1913 = vadd.f32 %v1911, %v1912
  %v1914 = vmul.f32 %v1898, 0.001953125
  %v1915 = vmul.f32 %v1913, 0.001953125
  %v1916 = vmul.f32 %v1914, %v1914
  %v1917 = vsub.f32 %v1915, %v1916
  %v1918 = vmax.f32 %v1917, 0.0
  %v1919 = vsub.f32 %v1837, %v1914
  %v1920 = vsub.f32 %v1838, %v1914
  %v1921 = vadd.f32 %v1918, 1e-05
  %v1922 = vrsqrt.pop %v1921
  %v1923 = vmul.f32 %v1919, %v1922
  %v1924 = vmul.f32 %v1920, %v1922
  %v1925 = vld [vmem:[%s1 + $0x300] sm:$0xff]
  %v1926 = vld [vmem:[%s1 + $0x308] sm:$0xff]
  %v1927 = vld [vmem:[%s1 + $0x310] sm:$0xff]
  %v1928 = vld [vmem:[%s1 + $0x318] sm:$0xff]
  %v1929 = vmul.f32 %v1882, %v1925
  %v1930 = vmul.f32 %v1883, %v1926
  %v1931 = vmul.f32 %v1923, %v1927
  %v1932 = vmul.f32 %v1924, %v1928
  %v1933 = vld [vmem:[%s1 + $0x320] sm:$0xff]
  %v1934 = vld [vmem:[%s1 + $0x328] sm:$0xff]
  %v1935 = vld [vmem:[%s1 + $0x330] sm:$0xff]
  %v1936 = vld [vmem:[%s1 + $0x338] sm:$0xff]
  %v1937 = vadd.f32 %v1929, %v1933
  %v1938 = vadd.f32 %v1930, %v1934
  %v1939 = vadd.f32 %v1931, %v1935
  %v1940 = vadd.f32 %v1932, %v1936
  %v1941 = vld [vmem:[%s1 + $0x340] sm:$0xff]
  %v1942 = vld [vmem:[%s1 + $0x348] sm:$0xff]
  %v1943 = vld [vmem:[%s1 + $0x350] sm:$0xff]
  %v1944 = vld [vmem:[%s1 + $0x358] sm:$0xff]
  %v1945 = vld [vmem:[%s1 + $0x360] sm:$0xff]
  %v1946 = vld [vmem:[%s1 + $0x368] sm:$0xff]
  %v1947 = vld [vmem:[%s1 + $0x370] sm:$0xff]
  %v1948 = vld [vmem:[%s1 + $0x378] sm:$0xff]
  %v1949 = vld [vmem:[%s1 + $0x380] sm:$0xff]
  %v1950 = vld [vmem:[%s1 + $0x388] sm:$0xff]
  %v1951 = vld [vmem:[%s1 + $0x390] sm:$0xff]
  %v1952 = vld [vmem:[%s1 + $0x398] sm:$0xff]
  %v1953 = vld [vmem:[%s1 + $0x3a0] sm:$0xff]
  %v1954 = vld [vmem:[%s1 + $0x3a8] sm:$0xff]
  %v1955 = vld [vmem:[%s1 + $0x3b0] sm:$0xff]
  %v1956 = vld [vmem:[%s1 + $0x3b8] sm:$0xff]
  %v1957 = vlaneseq
  %v1958 = vshrl.u32 %v1957, 7
  %v1959 = vsub.s32 4, %v1958
  %v1960 = vrot.slane %v18, %v1959
  %v1962 = vsel %vm460, %v1937, 0
  %v1965 = vsel %vm460, %v1938, 0
  %v1968 = vsel %vm460, %v1939, 0
  %v1971 = vsel %vm460, %v1940, 0
  %1973 = vmatprep.subr.mxu0 0.0
  %1974 = vmatpush1.msra.mxu0 %v1941
  %1975 = vmatprep.subr.mxu0 0.0
  %1976 = vmatpush1.msra.mxu0 %v1942
  %1977 = vmatprep.subr.mxu0 0.0
  %1978 = vmatpush1.msra.mxu0 %v1943
  %1979 = vmatprep.subr.mxu0 0.0
  %1980 = vmatpush1.msra.mxu0 %v1944
  %1981 = vmatprep.subr.mxu0 0.0
  %1982 = vmatpush1.msra.mxu0 %v1945
  %1983 = vmatprep.subr.mxu0 0.0
  %1984 = vmatpush1.msra.mxu0 %v1946
  %1985 = vmatprep.subr.mxu0 0.0
  %1986 = vmatpush1.msra.mxu0 %v1947
  %1987 = vmatprep.subr.mxu0 0.0
  %1988 = vmatpush1.msra.mxu0 %v1948
  %1989 = vmatprep.subr.mxu0 0.0
  %1990 = vmatpush1.msra.mxu0 0.0
  %1991 = vmatprep.subr.mxu0 0.0
  %1992 = vmatpush1.msra.mxu0 0.0
  %1993 = vmatprep.subr.mxu0 0.0
  %1994 = vmatpush1.msra.mxu0 0.0
  %1995 = vmatprep.subr.mxu0 0.0
  %1996 = vmatpush1.msra.mxu0 0.0
  %1997 = vmatprep.subr.mxu0 0.0
  %1998 = vmatpush1.msra.mxu0 0.0
  %1999 = vmatprep.subr.mxu0 0.0
  %2000 = vmatpush1.msra.mxu0 0.0
  %2001 = vmatprep.subr.mxu0 0.0
  %2002 = vmatpush1.msra.mxu0 0.0
  %2003 = vmatprep.subr.mxu0 0.0
  %2004 = vmatpush1.msra.mxu0 0.0
  %2005 = vmatprep.subr.mxu0 0.0
  %2006 = vmatpush1.msra.mxu0 0.0
  %2007 = vmatprep.subr.mxu0 0.0
  %2008 = vmatpush1.msra.mxu0 0.0
  %2009 = vmatprep.subr.mxu0 0.0
  %2010 = vmatpush1.msra.mxu0 0.0
  %2011 = vmatprep.subr.mxu0 0.0
  %2012 = vmatpush1.msra.mxu0 0.0
  %2013 = vmatprep.subr.mxu0 0.0
  %2014 = vmatpush1.msra.mxu0 0.0
  %2015 = vmatprep.subr.mxu0 0.0
  %2016 = vmatpush1.msra.mxu0 0.0
  %2017 = vmatprep.subr.mxu0 0.0
  %2018 = vmatpush1.msra.mxu0 0.0
  %2019 = vmatprep.subr.mxu0 0.0
  %2020 = vmatpush1.msra.mxu0 0.0
  %2021 = vmatprep.subr.mxu0 0.0
  %2022 = vmatpush1.msra.mxu0 0.0
  %2023 = vmatprep.subr.mxu0 0.0
  %2024 = vmatpush1.msra.mxu0 0.0
  %2025 = vmatprep.subr.mxu0 0.0
  %2026 = vmatpush1.msra.mxu0 0.0
  %2027 = vmatprep.subr.mxu0 0.0
  %2028 = vmatpush1.msra.mxu0 0.0
  %2029 = vmatprep.subr.mxu0 0.0
  %2030 = vmatpush1.msra.mxu0 0.0
  %2031 = vmatprep.subr.mxu0 0.0
  %2032 = vmatpush1.msra.mxu0 0.0
  %2033 = vmatprep.subr.mxu0 0.0
  %2034 = vmatpush1.msra.mxu0 0.0
  %2035 = vmatprep.subr.mxu0 0.0
  %2036 = vmatpush1.msra.mxu0 0.0
  %2037 = vmatprep.mubr.f32.mxu0 0.0
  %2038 = vmatmul.mubr.f32.gmra.mrb[0].mxu0 %v1962
  %v2039 = vpop.f32.mrb[0].mxu0
  %v2040 = vadd.f32 %v1960, %v2039
  %v2041 = vpop.f32.mrb[0].mxu0
  %2042 = vmatprep.mubr.f32.mxu0 0.0
  %2043 = vmatmul.mubr.f32.gmra.mrb[0].mxu0 %v1965
  %v2044 = vpop.f32.mrb[0].mxu0
  %v2045 = vadd.f32 %v1960, %v2044
  %v2046 = vpop.f32.mrb[0].mxu0
  %2047 = vmatprep.mubr.f32.mxu0 0.0
  %2048 = vmatmul.mubr.f32.gmra.mrb[0].mxu0 %v1968
  %v2049 = vpop.f32.mrb[0].mxu0
  %v2050 = vadd.f32 %v1960, %v2049
  %v2051 = vpop.f32.mrb[0].mxu0
  %2052 = vmatprep.mubr.f32.mxu0 0.0
  %2053 = vmatmul.mubr.f32.gmra.mrb[0].mxu0 %v1971
  %v2054 = vpop.f32.mrb[0].mxu0
  %v2055 = vadd.f32 %v1960, %v2054
  %v2056 = vpop.f32.mrb[0].mxu0
  %2057 = vdwg.mxu0
  %v2058 = vlaneseq
  %v2059 = vshrl.u32 %v2058, 7
  %v2060 = vsub.s32 5, %v2059
  %v2061 = vrot.slane %v18, %v2060
  %2062 = vmatprep.subr.mxu0 0.0
  %2063 = vmatpush1.msra.mxu0 %v1949
  %2064 = vmatprep.subr.mxu0 0.0
  %2065 = vmatpush1.msra.mxu0 %v1950
  %2066 = vmatprep.subr.mxu0 0.0
  %2067 = vmatpush1.msra.mxu0 %v1951
  %2068 = vmatprep.subr.mxu0 0.0
  %2069 = vmatpush1.msra.mxu0 %v1952
  %2070 = vmatprep.subr.mxu0 0.0
  %2071 = vmatpush1.msra.mxu0 %v1953
  %2072 = vmatprep.subr.mxu0 0.0
  %2073 = vmatpush1.msra.mxu0 %v1954
  %2074 = vmatprep.subr.mxu0 0.0
  %2075 = vmatpush1.msra.mxu0 %v1955
  %2076 = vmatprep.subr.mxu0 0.0
  %2077 = vmatpush1.msra.mxu0 %v1956
  %2078 = vmatprep.subr.mxu0 0.0
  %2079 = vmatpush1.msra.mxu0 0.0
  %2080 = vmatprep.subr.mxu0 0.0
  %2081 = vmatpush1.msra.mxu0 0.0
  %2082 = vmatprep.subr.mxu0 0.0
  %2083 = vmatpush1.msra.mxu0 0.0
  %2084 = vmatprep.subr.mxu0 0.0
  %2085 = vmatpush1.msra.mxu0 0.0
  %2086 = vmatprep.subr.mxu0 0.0
  %2087 = vmatpush1.msra.mxu0 0.0
  %2088 = vmatprep.subr.mxu0 0.0
  %2089 = vmatpush1.msra.mxu0 0.0
  %2090 = vmatprep.subr.mxu0 0.0
  %2091 = vmatpush1.msra.mxu0 0.0
  %2092 = vmatprep.subr.mxu0 0.0
  %2093 = vmatpush1.msra.mxu0 0.0
  %2094 = vmatprep.subr.mxu0 0.0
  %2095 = vmatpush1.msra.mxu0 0.0
  %2096 = vmatprep.subr.mxu0 0.0
  %2097 = vmatpush1.msra.mxu0 0.0
  %2098 = vmatprep.subr.mxu0 0.0
  %2099 = vmatpush1.msra.mxu0 0.0
  %2100 = vmatprep.subr.mxu0 0.0
  %2101 = vmatpush1.msra.mxu0 0.0
  %2102 = vmatprep.subr.mxu0 0.0
  %2103 = vmatpush1.msra.mxu0 0.0
  %2104 = vmatprep.subr.mxu0 0.0
  %2105 = vmatpush1.msra.mxu0 0.0
  %2106 = vmatprep.subr.mxu0 0.0
  %2107 = vmatpush1.msra.mxu0 0.0
  %2108 = vmatprep.subr.mxu0 0.0
  %2109 = vmatpush1.msra.mxu0 0.0
  %2110 = vmatprep.subr.mxu0 0.0
  %2111 = vmatpush1.msra.mxu0 0.0
  %2112 = vmatprep.subr.mxu0 0.0
  %2113 = vmatpush1.msra.mxu0 0.0
  %2114 = vmatprep.subr.mxu0 0.0
  %2115 = vmatpush1.msra.mxu0 0.0
  %2116 = vmatprep.subr.mxu0 0.0
  %2117 = vmatpush1.msra.mxu0 0.0
  %2118 = vmatprep.subr.mxu0 0.0
  %2119 = vmatpush1.msra.mxu0 0.0
  %2120 = vmatprep.subr.mxu0 0.0
  %2121 = vmatpush1.msra.mxu0 0.0
  %2122 = vmatprep.subr.mxu0 0.0
  %2123 = vmatpush1.msra.mxu0 0.0
  %2124 = vmatprep.subr.mxu0 0.0
  %2125 = vmatpush1.msra.mxu0 0.0
  %2126 = vmatprep.mubr.f32.mxu0 0.0
  %2127 = vmatmul.mubr.f32.gmra.mrb[0].mxu0 %v1962
  %v2128 = vpop.f32.mrb[0].mxu0
  %v2129 = vadd.f32 %v2061, %v2128
  %v2130 = vpop.f32.mrb[0].mxu0
  %2131 = vmatprep.mubr.f32.mxu0 0.0
  %2132 = vmatmul.mubr.f32.gmra.mrb[0].mxu0 %v1965
  %v2133 = vpop.f32.mrb[0].mxu0
  %v2134 = vadd.f32 %v2061, %v2133
  %v2135 = vpop.f32.mrb[0].mxu0
  %2136 = vmatprep.mubr.f32.mxu0 0.0
  %2137 = vmatmul.mubr.f32.gmra.mrb[0].mxu0 %v1968
  %v2138 = vpop.f32.mrb[0].mxu0
  %v2139 = vadd.f32 %v2061, %v2138
  %v2140 = vpop.f32.mrb[0].mxu0
  %2141 = vmatprep.mubr.f32.mxu0 0.0
  %2142 = vmatmul.mubr.f32.gmra.mrb[0].mxu0 %v1971
  %v2143 = vpop.f32.mrb[0].mxu0
  %v2144 = vadd.f32 %v2061, %v2143
  %v2145 = vpop.f32.mrb[0].mxu0
  %2146 = vdwg.mxu0
  %v2147 = vmul.f32 %v2129, 0.5
  %v2148 = vmul.f32 %v2134, 0.5
  %v2149 = vmul.f32 %v2139, 0.5
  %v2150 = vmul.f32 %v2144, 0.5
  %v2151 = vtanh.pop %v2147
  %v2152 = vtanh.pop %v2148
  %v2153 = vtanh.pop %v2149
  %v2154 = vtanh.pop %v2150
  %v2155 = vmul.f32 %v2151, 0.5
  %v2156 = vmul.f32 %v2152, 0.5
  %v2157 = vmul.f32 %v2153, 0.5
  %v2158 = vmul.f32 %v2154, 0.5
  %v2159 = vadd.f32 %v2155, 0.5
  %v2160 = vadd.f32 %v2156, 0.5
  %v2161 = vadd.f32 %v2157, 0.5
  %v2162 = vadd.f32 %v2158, 0.5
  %v2163 = vmul.f32 %v2040, %v2159
  %v2164 = vmul.f32 %v2045, %v2160
  %v2165 = vmul.f32 %v2050, %v2161
  %v2166 = vmul.f32 %v2055, %v2162
  %v2167 = vld [vmem:[%s1 + $0x3c0] sm:$0xff]
  %v2168 = vld [vmem:[%s1 + $0x3c8] sm:$0xff]
  %v2169 = vld [vmem:[%s1 + $0x3d0] sm:$0xff]
  %v2170 = vld [vmem:[%s1 + $0x3d8] sm:$0xff]
  %v2171 = vld [vmem:[%s1 + $0x3e0] sm:$0xff]
  %v2172 = vld [vmem:[%s1 + $0x3e8] sm:$0xff]
  %v2173 = vld [vmem:[%s1 + $0x3f0] sm:$0xff]
  %v2174 = vld [vmem:[%s1 + $0x3f8] sm:$0xff]
  %v2175 = vlaneseq
  %v2176 = vshrl.u32 %v2175, 7
  %v2177 = vsub.s32 6, %v2176
  %v2178 = vrot.slane %v18, %v2177
  %v2180 = vsel %vm460, %v2163, 0
  %v2183 = vsel %vm460, %v2164, 0
  %v2186 = vsel %vm460, %v2165, 0
  %v2189 = vsel %vm460, %v2166, 0
  %2191 = vmatprep.subr.mxu0 0.0
  %2192 = vmatpush1.msra.mxu0 %v2167
  %2193 = vmatprep.subr.mxu0 0.0
  %2194 = vmatpush1.msra.mxu0 %v2168
  %2195 = vmatprep.subr.mxu0 0.0
  %2196 = vmatpush1.msra.mxu0 %v2169
  %2197 = vmatprep.subr.mxu0 0.0
  %2198 = vmatpush1.msra.mxu0 %v2170
  %2199 = vmatprep.subr.mxu0 0.0
  %2200 = vmatpush1.msra.mxu0 %v2171
  %2201 = vmatprep.subr.mxu0 0.0
  %2202 = vmatpush1.msra.mxu0 %v2172
  %2203 = vmatprep.subr.mxu0 0.0
  %2204 = vmatpush1.msra.mxu0 %v2173
  %2205 = vmatprep.subr.mxu0 0.0
  %2206 = vmatpush1.msra.mxu0 %v2174
  %2207 = vmatprep.subr.mxu0 0.0
  %2208 = vmatpush1.msra.mxu0 0.0
  %2209 = vmatprep.subr.mxu0 0.0
  %2210 = vmatpush1.msra.mxu0 0.0
  %2211 = vmatprep.subr.mxu0 0.0
  %2212 = vmatpush1.msra.mxu0 0.0
  %2213 = vmatprep.subr.mxu0 0.0
  %2214 = vmatpush1.msra.mxu0 0.0
  %2215 = vmatprep.subr.mxu0 0.0
  %2216 = vmatpush1.msra.mxu0 0.0
  %2217 = vmatprep.subr.mxu0 0.0
  %2218 = vmatpush1.msra.mxu0 0.0
  %2219 = vmatprep.subr.mxu0 0.0
  %2220 = vmatpush1.msra.mxu0 0.0
  %2221 = vmatprep.subr.mxu0 0.0
  %2222 = vmatpush1.msra.mxu0 0.0
  %2223 = vmatprep.subr.mxu0 0.0
  %2224 = vmatpush1.msra.mxu0 0.0
  %2225 = vmatprep.subr.mxu0 0.0
  %2226 = vmatpush1.msra.mxu0 0.0
  %2227 = vmatprep.subr.mxu0 0.0
  %2228 = vmatpush1.msra.mxu0 0.0
  %2229 = vmatprep.subr.mxu0 0.0
  %2230 = vmatpush1.msra.mxu0 0.0
  %2231 = vmatprep.subr.mxu0 0.0
  %2232 = vmatpush1.msra.mxu0 0.0
  %2233 = vmatprep.subr.mxu0 0.0
  %2234 = vmatpush1.msra.mxu0 0.0
  %2235 = vmatprep.subr.mxu0 0.0
  %2236 = vmatpush1.msra.mxu0 0.0
  %2237 = vmatprep.subr.mxu0 0.0
  %2238 = vmatpush1.msra.mxu0 0.0
  %2239 = vmatprep.subr.mxu0 0.0
  %2240 = vmatpush1.msra.mxu0 0.0
  %2241 = vmatprep.subr.mxu0 0.0
  %2242 = vmatpush1.msra.mxu0 0.0
  %2243 = vmatprep.subr.mxu0 0.0
  %2244 = vmatpush1.msra.mxu0 0.0
  %2245 = vmatprep.subr.mxu0 0.0
  %2246 = vmatpush1.msra.mxu0 0.0
  %2247 = vmatprep.subr.mxu0 0.0
  %2248 = vmatpush1.msra.mxu0 0.0
  %2249 = vmatprep.subr.mxu0 0.0
  %2250 = vmatpush1.msra.mxu0 0.0
  %2251 = vmatprep.subr.mxu0 0.0
  %2252 = vmatpush1.msra.mxu0 0.0
  %2253 = vmatprep.subr.mxu0 0.0
  %2254 = vmatpush1.msra.mxu0 0.0
  %2255 = vmatprep.mubr.f32.mxu0 0.0
  %2256 = vmatmul.mubr.f32.gmra.mrb[0].mxu0 %v2180
  %v2257 = vpop.f32.mrb[0].mxu0
  %v2258 = vadd.f32 %v2178, %v2257
  %v2259 = vpop.f32.mrb[0].mxu0
  %2260 = vmatprep.mubr.f32.mxu0 0.0
  %2261 = vmatmul.mubr.f32.gmra.mrb[0].mxu0 %v2183
  %v2262 = vpop.f32.mrb[0].mxu0
  %v2263 = vadd.f32 %v2178, %v2262
  %v2264 = vpop.f32.mrb[0].mxu0
  %2265 = vmatprep.mubr.f32.mxu0 0.0
  %2266 = vmatmul.mubr.f32.gmra.mrb[0].mxu0 %v2186
  %v2267 = vpop.f32.mrb[0].mxu0
  %v2268 = vadd.f32 %v2178, %v2267
  %v2269 = vpop.f32.mrb[0].mxu0
  %2270 = vmatprep.mubr.f32.mxu0 0.0
  %2271 = vmatmul.mubr.f32.gmra.mrb[0].mxu0 %v2189
  %v2272 = vpop.f32.mrb[0].mxu0
  %v2273 = vadd.f32 %v2178, %v2272
  %v2274 = vpop.f32.mrb[0].mxu0
  %2275 = vdwg.mxu0
  %vm2276 = vcmask 64512
  %2277 = vst.msk [vmem:[%s4] sm:$0xff] %vm2276, %v2258
  %2278 = vst.msk [vmem:[%s4 + $0x8] sm:$0xff] %vm2276, %v2263
  %s2279 = scalar_lea.vmem %s4, 16
  %2280 = vst.msk [vmem:[%s2279] sm:$0xff] %vm2276, %v2268
  %2281 = vst.msk [vmem:[%s2279 + $0x8] sm:$0xff] %vm2276, %v2273
  // Predicated region
  $region18: #{forward.1} parent=0 // pred_check
    _
  $region19: #{forward.1} parent=0 // pred_check_branch
    %2283 = sbr.rel (0) target = $region21
  $region20: #{forward.1} parent=0 // pred_region
    _
  $region21: #{forward.1} parent=0 // pred_fallthru
    _
  // Predicated region
  $region22: #{forward.1} parent=0 // pred_check
    _
  $region23: #{forward.1} parent=0 // pred_check_branch
    %2285 = sbr.rel (0) target = $region25
  $region24: #{forward.1} parent=0 // pred_region
    _
  $region25: #{forward.1} parent=0 // pred_fallthru
    _

</llo_original>
